<compile_context>
chip_gen: v6e
topology: v6e:2x2x1
jax: 0.10.0
libtpu: 0.0.40
codegen_flags: <defaults>
</compile_context>

<pallas_src>
import functools

import jax
import jax.numpy as jnp
import numpy as np
from jax import lax
from jax.experimental import pallas as pl
from jax.experimental.pallas import tpu as pltpu


def _round_up(x, m):
    return ((x + m - 1) // m) * m


def _linkprop_kernel(n_ref, ue_ref, ie_ref,
                     u_out_ref, i_out_ref,
                     u_cur, i_cur, u_acc, i_acc,
                     *, tu, ti, inv_layers):
    l = pl.program_id(0)       # propagation layer (sequential)
    ut = pl.program_id(1)      # row tile of N (user axis)
    it = pl.program_id(2)      # col tile of N (item axis)
    n_l = pl.num_programs(0)
    n_u = pl.num_programs(1)
    n_i = pl.num_programs(2)

    # ---- very first grid step: load layer-0 state, seed the layer sums ----
    @pl.when((l == 0) & (ut == 0) & (it == 0))
    def _init():
        u_out_ref[...] = ue_ref[...]                       # layer-0 term of the mean
        i_out_ref[...] = ie_ref[...]
        u_cur[...] = ue_ref[...].astype(u_cur.dtype)       # bf16 MXU operands
        i_cur[...] = ie_ref[...].astype(i_cur.dtype)

    # ---- start of every propagation layer: reset per-layer accumulators ----
    @pl.when((ut == 0) & (it == 0))
    def _zero_acc():
        u_acc[...] = jnp.zeros_like(u_acc)
        i_acc[...] = jnp.zeros_like(i_acc)

    u_start = pl.multiple_of(ut * tu, tu)
    i_start = pl.multiple_of(it * ti, ti)

    n_blk = n_ref[...]                                     # (tu, ti) bf16, streamed
    i_slab = i_cur[pl.ds(i_start, ti), :]                  # (ti, D) bf16
    u_slab = u_cur[pl.ds(u_start, tu), :]                  # (tu, D) bf16

    # U_{k+1}[u_tile] += N[u_tile, i_tile] @ I_k[i_tile]
    u_acc[pl.ds(u_start, tu), :] += jnp.dot(
        n_blk, i_slab, preferred_element_type=jnp.float32)

    # I_{k+1}[i_tile] += N[u_tile, i_tile]^T @ U_k[u_tile]
    # (no materialized N^T: contract over the user axis of the same block)
    i_acc[pl.ds(i_start, ti), :] += lax.dot_general(
        n_blk, u_slab, (((0,), (0,)), ((), ())),
        preferred_element_type=jnp.float32)

    # ---- end of a layer: fold into the running sums, swap cur <- new ----
    @pl.when((ut == n_u - 1) & (it == n_i - 1))
    def _finish_layer():
        u_out_ref[...] += u_acc[...]
        i_out_ref[...] += i_acc[...]
        u_cur[...] = u_acc[...].astype(u_cur.dtype)
        i_cur[...] = i_acc[...].astype(i_cur.dtype)

    # ---- very last grid step: turn the sums into the layer mean ----
    @pl.when((l == n_l - 1) & (ut == n_u - 1) & (it == n_i - 1))
    def _finalize():
        u_out_ref[...] *= jnp.float32(inv_layers)
        i_out_ref[...] *= jnp.float32(inv_layers)


def linkprop_forward(norm, user_emb, item_emb, *, r, t):
    """Pallas implementation of LinkProp_Encoder.forward()."""
    U, I = norm.shape
    D = user_emb.shape[1]

    # t != 0.0 -> the PyTorch loop body never runs: mean over a single layer
    # is just the original embeddings (no kernel needed).
    r_eff = r if t == 0.0 else 0
    if r_eff == 0:
        return (jnp.asarray(user_emb, jnp.float32),
                jnp.asarray(item_emb, jnp.float32))

    # --- tile / padding choices (lane = 128, sublane = 8) ---
    TU = _round_up(U, 8) if U <= 512 else 256
    TI = _round_up(I, 128) if I <= 1024 else 512
    U_pad = _round_up(U, TU)
    I_pad = _round_up(I, TI)
    D_pad = _round_up(D, 128)

    # bf16 MXU inputs; zero padding keeps the propagated values exact in the
    # padded rows / columns, so slicing the outputs back is lossless.
    norm_p = jnp.zeros((U_pad, I_pad), jnp.bfloat16).at[:U, :I].set(
        jnp.asarray(norm, jnp.float32).astype(jnp.bfloat16))
    ue_p = jnp.zeros((U_pad, D_pad), jnp.float32).at[:U, :D].set(
        jnp.asarray(user_emb, jnp.float32))
    ie_p = jnp.zeros((I_pad, D_pad), jnp.float32).at[:I, :D].set(
        jnp.asarray(item_emb, jnp.float32))

    grid = (r_eff, U_pad // TU, I_pad // TI)

    kernel = functools.partial(_linkprop_kernel, tu=TU, ti=TI,
                               inv_layers=float(1.0 / (r_eff + 1)))

    emb_elems = (U_pad + I_pad) * D_pad
    vmem_bytes = (
        2 * TU * TI * 2          # streamed N block, bf16, double-buffered
        + 2 * emb_elems * 4      # resident layer-0 embedding inputs (f32)
        + emb_elems * 4          # resident outputs (f32 running layer-sums)
        + emb_elems * (2 + 4)    # cur (bf16) + per-layer acc (f32) scratch
        + (2 << 20))             # headroom
    vmem_limit = int(min(vmem_bytes, 64 * 1024 * 1024))   # stay under v7x cap

    flops = 4.0 * r_eff * U_pad * I_pad * D_pad            # 2 matmuls / layer
    bytes_accessed = (r_eff * U_pad * I_pad * 2            # N streamed per layer
                      + 3 * emb_elems * 4)                  # emb in + out

    u_out_p, i_out_p = pl.pallas_call(
        kernel,
        out_shape=(jax.ShapeDtypeStruct((U_pad, D_pad), jnp.float32),
                   jax.ShapeDtypeStruct((I_pad, D_pad), jnp.float32)),
        grid_spec=pltpu.PrefetchScalarGridSpec(
            num_scalar_prefetch=0,
            grid=grid,
            in_specs=[
                pl.BlockSpec((TU, TI), lambda l, u, i: (u, i)),        # N stream
                pl.BlockSpec((U_pad, D_pad), lambda l, u, i: (0, 0)),  # user emb
                pl.BlockSpec((I_pad, D_pad), lambda l, u, i: (0, 0)),  # item emb
            ],
            out_specs=(
                pl.BlockSpec((U_pad, D_pad), lambda l, u, i: (0, 0)),
                pl.BlockSpec((I_pad, D_pad), lambda l, u, i: (0, 0)),
            ),
            scratch_shapes=[
                pltpu.VMEM((U_pad, D_pad), jnp.bfloat16),   # u_cur
                pltpu.VMEM((I_pad, D_pad), jnp.bfloat16),   # i_cur
                pltpu.VMEM((U_pad, D_pad), jnp.float32),    # u_acc (layer k+1)
                pltpu.VMEM((I_pad, D_pad), jnp.float32),    # i_acc (layer k+1)
            ]),
        compiler_params=pltpu.CompilerParams(
            # TODO(synk): row/col tile axes share the resident cur/acc state, so
            # they cannot be marked "parallel" for v7x megacore in this design.
            dimension_semantics=("arbitrary", "arbitrary", "arbitrary"),
            vmem_limit_bytes=vmem_limit),
        cost_estimate=pl.CostEstimate(
            flops=int(flops), transcendentals=0,
            bytes_accessed=int(bytes_accessed)),
    )(norm_p, ue_p, ie_p)

    return u_out_p[:U, :D], i_out_p[:I, :D]


# ----------------------------------------------------------------------------
# Glue: build the dense "sparse_norm" matrix exactly as the PyTorch __init__
# does (normalization precompute; not part of the forward hot path).
# ----------------------------------------------------------------------------
def build_sparse_norm(adj, alpha, beta, gamma, delta):
    adj = adj.astype(jnp.float32)                       # (U, I)
    user_deg = adj.sum(axis=1)                          # (U,)
    item_deg = adj.sum(axis=0)                          # (I,)

    def neg_pow(x, p):
        y = jnp.power(x, -p)
        return jnp.where(jnp.isinf(y), 0.0, y)

    ua = neg_pow(user_deg, alpha)
    ib = neg_pow(item_deg, beta)
    ug = neg_pow(user_deg, gamma)
    idl = neg_pow(item_deg, delta)

    sparse_ab = ua[:, None] * adj * ib[None, :]         # (U, I)
    sparse_gd = ug[:, None] * adj * idl[None, :]        # (U, I)
    return sparse_ab @ adj.T @ sparse_gd                # (U, I)


def xavier_uniform(key, shape):
    fan_in, fan_out = shape[0], shape[1]
    bound = float(np.sqrt(6.0 / (fan_in + fan_out)))
    return jax.random.uniform(key, shape, jnp.float32, minval=-bound, maxval=bound)


if __name__ == "__main__":
    # Small, deterministic synthetic problem.
    user_num, item_num, emb_size = 64, 48, 32
    alpha, beta, gamma, delta = 0.3, 0.2, 0.4, 0.1
    r, t = 3, 0.0

    key = jax.random.PRNGKey(0)
    k_adj, k_user, k_item = jax.random.split(key, 3)

    adj = (jax.random.uniform(k_adj, (user_num, item_num)) < 0.15).astype(jnp.float32)
    norm = build_sparse_norm(adj, alpha, beta, gamma, delta)

    user_emb = xavier_uniform(k_user, (user_num, emb_size))
    item_emb = xavier_uniform(k_item, (item_num, emb_size))

    u_out, i_out = linkprop_forward(norm, user_emb, item_emb, r=r, t=t)
    u_out, i_out = jax.block_until_ready((u_out, i_out))

    # Reference that mirrors the kernel's numerics exactly (bf16 N / bf16
    # propagated activations, f32 accumulation). Relative to the pure-f32
    # PyTorch math this only differs by bf16 input rounding (~1e-2 rel).
    nb = norm.astype(jnp.bfloat16).astype(jnp.float32)
    u_sum = user_emb.astype(jnp.float32)
    i_sum = item_emb.astype(jnp.float32)
    u_cur = user_emb.astype(jnp.bfloat16)
    i_cur = item_emb.astype(jnp.bfloat16)
    for _ in range(r):
        u_new = jnp.dot(nb, i_cur.astype(jnp.float32))
        i_new = jnp.dot(nb.T, u_cur.astype(jnp.float32))
        u_sum = u_sum + u_new
        i_sum = i_sum + i_new
        u_cur = u_new.astype(jnp.bfloat16)
        i_cur = i_new.astype(jnp.bfloat16)
    u_ref = u_sum / (r + 1)
    i_ref = i_sum / (r + 1)

    assert np.allclose(np.asarray(u_out), np.asarray(u_ref), rtol=2e-3, atol=1e-3)
    assert np.allclose(np.asarray(i_out), np.asarray(i_ref), rtol=2e-3, atol=1e-3)

    print("KERNEL_OK")
</pallas_src>

<mosaic_0001>
module attributes {stable_mosaic.version = 11 : i64} {
  func.func @_linkprop_kernel(%arg0: i32, %arg1: i32, %arg2: i32, %arg3: memref<64x128xbf16, #tpu.memory_space<vmem>>, %arg4: memref<64x128xf32, #tpu.memory_space<vmem>>, %arg5: memref<128x128xf32, #tpu.memory_space<vmem>>, %arg6: memref<64x128xf32, #tpu.memory_space<vmem>>, %arg7: memref<128x128xf32, #tpu.memory_space<vmem>>, %arg8: memref<64x128xbf16, #tpu.memory_space<vmem>>, %arg9: memref<128x128xbf16, #tpu.memory_space<vmem>>, %arg10: memref<64x128xf32, #tpu.memory_space<vmem>>, %arg11: memref<128x128xf32, #tpu.memory_space<vmem>>) attributes {dimension_semantics = [#tpu.dimension_semantics<arbitrary>, #tpu.dimension_semantics<arbitrary>, #tpu.dimension_semantics<arbitrary>], iteration_bounds = array<i64: 3, 1, 1>, scalar_prefetch = 0 : i64, scratch_operands = 4 : i64, tpu.core_type = #tpu.core_type<tc>, window_params = [{transform_indices = @transform_0, window_bounds = array<i64: 64, 128>}, {pipeline_mode = #tpu.pipeline_mode<synchronous>, transform_indices = @transform_1, window_bounds = array<i64: 64, 128>}, {pipeline_mode = #tpu.pipeline_mode<synchronous>, transform_indices = @transform_2, window_bounds = array<i64: 128, 128>}, {pipeline_mode = #tpu.pipeline_mode<synchronous>, transform_indices = @transform_3, window_bounds = array<i64: 64, 128>}, {pipeline_mode = #tpu.pipeline_mode<synchronous>, transform_indices = @transform_4, window_bounds = array<i64: 128, 128>}]} {
    %c0_i32 = arith.constant 0 : i32
    %0 = arith.cmpi eq, %arg0, %c0_i32 : i32
    %c0_i32_0 = arith.constant 0 : i32
    %1 = arith.cmpi eq, %arg1, %c0_i32_0 : i32
    %2 = arith.andi %0, %1 : i1
    %c0_i32_1 = arith.constant 0 : i32
    %3 = arith.cmpi eq, %arg2, %c0_i32_1 : i32
    %4 = arith.andi %2, %3 : i1
    %5 = arith.extui %4 : i1 to i32
    %c0_i32_2 = arith.constant 0 : i32
    %6 = arith.cmpi ne, %5, %c0_i32_2 : i32
    scf.if %6 {
      %c0_20 = arith.constant 0 : index
      %c0_21 = arith.constant 0 : index
      %45 = vector.load %arg4[%c0_20, %c0_21] : memref<64x128xf32, #tpu.memory_space<vmem>>, vector<64x128xf32>
      %c0_22 = arith.constant 0 : index
      %c0_23 = arith.constant 0 : index
      %46 = vector.load %arg6[%c0_22, %c0_23] : memref<64x128xf32, #tpu.memory_space<vmem>>, vector<64x128xf32>
      tpu.vector_store %arg6[%c0_22, %c0_23], %45 {strides = array<i32>} : memref<64x128xf32, #tpu.memory_space<vmem>>, vector<64x128xf32>,
      %c0_24 = arith.constant 0 : index
      %c0_25 = arith.constant 0 : index
      %47 = vector.load %arg5[%c0_24, %c0_25] : memref<128x128xf32, #tpu.memory_space<vmem>>, vector<128x128xf32>
      %c0_26 = arith.constant 0 : index
      %c0_27 = arith.constant 0 : index
      %48 = vector.load %arg7[%c0_26, %c0_27] : memref<128x128xf32, #tpu.memory_space<vmem>>, vector<128x128xf32>
      tpu.vector_store %arg7[%c0_26, %c0_27], %47 {strides = array<i32>} : memref<128x128xf32, #tpu.memory_space<vmem>>, vector<128x128xf32>,
      %c0_28 = arith.constant 0 : index
      %c0_29 = arith.constant 0 : index
      %49 = vector.load %arg4[%c0_28, %c0_29] : memref<64x128xf32, #tpu.memory_space<vmem>>, vector<64x128xf32>
      %50 = arith.truncf %49 : vector<64x128xf32> to vector<64x128xbf16>
      %c0_30 = arith.constant 0 : index
      %c0_31 = arith.constant 0 : index
      %51 = vector.load %arg8[%c0_30, %c0_31] : memref<64x128xbf16, #tpu.memory_space<vmem>>, vector<64x128xbf16>
      tpu.vector_store %arg8[%c0_30, %c0_31], %50 {strides = array<i32>} : memref<64x128xbf16, #tpu.memory_space<vmem>>, vector<64x128xbf16>,
      %c0_32 = arith.constant 0 : index
      %c0_33 = arith.constant 0 : index
      %52 = vector.load %arg5[%c0_32, %c0_33] : memref<128x128xf32, #tpu.memory_space<vmem>>, vector<128x128xf32>
      %53 = arith.truncf %52 : vector<128x128xf32> to vector<128x128xbf16>
      %c0_34 = arith.constant 0 : index
      %c0_35 = arith.constant 0 : index
      %54 = vector.load %arg9[%c0_34, %c0_35] : memref<128x128xbf16, #tpu.memory_space<vmem>>, vector<128x128xbf16>
      tpu.vector_store %arg9[%c0_34, %c0_35], %53 {strides = array<i32>} : memref<128x128xbf16, #tpu.memory_space<vmem>>, vector<128x128xbf16>,
    } else {
    }
    %c0_i32_3 = arith.constant 0 : i32
    %7 = arith.cmpi eq, %arg1, %c0_i32_3 : i32
    %c0_i32_4 = arith.constant 0 : i32
    %8 = arith.cmpi eq, %arg2, %c0_i32_4 : i32
    %9 = arith.andi %7, %8 : i1
    %10 = arith.extui %9 : i1 to i32
    %c0_i32_5 = arith.constant 0 : i32
    %11 = arith.cmpi ne, %10, %c0_i32_5 : i32
    scf.if %11 {
      %cst_20 = arith.constant 0.000000e+00 : f32
      %45 = vector.broadcast %cst_20 : f32 to vector<64x128xf32>
      %c0_21 = arith.constant 0 : index
      %c0_22 = arith.constant 0 : index
      %46 = vector.load %arg10[%c0_21, %c0_22] : memref<64x128xf32, #tpu.memory_space<vmem>>, vector<64x128xf32>
      tpu.vector_store %arg10[%c0_21, %c0_22], %45 {strides = array<i32>} : memref<64x128xf32, #tpu.memory_space<vmem>>, vector<64x128xf32>,
      %cst_23 = arith.constant 0.000000e+00 : f32
      %47 = vector.broadcast %cst_23 : f32 to vector<128x128xf32>
      %c0_24 = arith.constant 0 : index
      %c0_25 = arith.constant 0 : index
      %48 = vector.load %arg11[%c0_24, %c0_25] : memref<128x128xf32, #tpu.memory_space<vmem>>, vector<128x128xf32>
      tpu.vector_store %arg11[%c0_24, %c0_25], %47 {strides = array<i32>} : memref<128x128xf32, #tpu.memory_space<vmem>>, vector<128x128xf32>,
    } else {
    }
    %c64_i32 = arith.constant 64 : i32
    %12 = arith.muli %arg1, %c64_i32 : i32
    %13 = tpu.assume_multiple %12, 64 : i32
    %c128_i32 = arith.constant 128 : i32
    %14 = arith.muli %arg2, %c128_i32 : i32
    %15 = tpu.assume_multiple %14, 128 : i32
    %c0 = arith.constant 0 : index
    %c0_6 = arith.constant 0 : index
    %16 = vector.load %arg3[%c0, %c0_6] : memref<64x128xbf16, #tpu.memory_space<vmem>>, vector<64x128xbf16>
    %17 = arith.index_cast %15 : i32 to index
    %c0_7 = arith.constant 0 : index
    %18 = vector.load %arg9[%17, %c0_7] : memref<128x128xbf16, #tpu.memory_space<vmem>>, vector<128x128xbf16>
    %19 = arith.index_cast %13 : i32 to index
    %c0_8 = arith.constant 0 : index
    %20 = vector.load %arg8[%19, %c0_8] : memref<64x128xbf16, #tpu.memory_space<vmem>>, vector<64x128xbf16>
    %21 = arith.index_cast %13 : i32 to index
    %c0_9 = arith.constant 0 : index
    %22 = vector.load %arg10[%21, %c0_9] : memref<64x128xf32, #tpu.memory_space<vmem>>, vector<64x128xf32>
    %cst = arith.constant dense<0.000000e+00> : vector<64x128xf32>
    %23 = tpu.matmul %16, %18, %cst {dimension_numbers = #tpu.dot_dimension_numbers<[1], [0], [0], [1], [0, 0, 1, 1], [], []>} : vector<64x128xbf16>, vector<128x128xbf16>, vector<64x128xf32> -> vector<64x128xf32>
    %24 = arith.addf %22, %23 : vector<64x128xf32>
    %25 = arith.index_cast %13 : i32 to index
    %c0_10 = arith.constant 0 : index
    %26 = vector.load %arg10[%25, %c0_10] : memref<64x128xf32, #tpu.memory_space<vmem>>, vector<64x128xf32>
    tpu.vector_store %arg10[%25, %c0_10], %24 {strides = array<i32>} : memref<64x128xf32, #tpu.memory_space<vmem>>, vector<64x128xf32>,
    %27 = arith.index_cast %15 : i32 to index
    %c0_11 = arith.constant 0 : index
    %28 = vector.load %arg11[%27, %c0_11] : memref<128x128xf32, #tpu.memory_space<vmem>>, vector<128x128xf32>
    %cst_12 = arith.constant dense<0.000000e+00> : vector<128x128xf32>
    %29 = tpu.matmul %16, %20, %cst_12 {dimension_numbers = #tpu.dot_dimension_numbers<[0], [0], [1], [1], [0, 1, 1, 1], [], []>} : vector<64x128xbf16>, vector<64x128xbf16>, vector<128x128xf32> -> vector<128x128xf32>
    %30 = arith.addf %28, %29 : vector<128x128xf32>
    %31 = arith.index_cast %15 : i32 to index
    %c0_13 = arith.constant 0 : index
    %32 = vector.load %arg11[%31, %c0_13] : memref<128x128xf32, #tpu.memory_space<vmem>>, vector<128x128xf32>
    tpu.vector_store %arg11[%31, %c0_13], %30 {strides = array<i32>} : memref<128x128xf32, #tpu.memory_space<vmem>>, vector<128x128xf32>,
    %c0_i32_14 = arith.constant 0 : i32
    %33 = arith.cmpi eq, %arg1, %c0_i32_14 : i32
    %c0_i32_15 = arith.constant 0 : i32
    %34 = arith.cmpi eq, %arg2, %c0_i32_15 : i32
    %35 = arith.andi %33, %34 : i1
    %36 = arith.extui %35 : i1 to i32
    %c0_i32_16 = arith.constant 0 : i32
    %37 = arith.cmpi ne, %36, %c0_i32_16 : i32
    scf.if %37 {
      %c0_20 = arith.constant 0 : index
      %c0_21 = arith.constant 0 : index
      %45 = vector.load %arg6[%c0_20, %c0_21] : memref<64x128xf32, #tpu.memory_space<vmem>>, vector<64x128xf32>
      %c0_22 = arith.constant 0 : index
      %c0_23 = arith.constant 0 : index
      %46 = vector.load %arg10[%c0_22, %c0_23] : memref<64x128xf32, #tpu.memory_space<vmem>>, vector<64x128xf32>
      %47 = arith.addf %45, %46 : vector<64x128xf32>
      %c0_24 = arith.constant 0 : index
      %c0_25 = arith.constant 0 : index
      %48 = vector.load %arg6[%c0_24, %c0_25] : memref<64x128xf32, #tpu.memory_space<vmem>>, vector<64x128xf32>
      tpu.vector_store %arg6[%c0_24, %c0_25], %47 {strides = array<i32>} : memref<64x128xf32, #tpu.memory_space<vmem>>, vector<64x128xf32>,
      %c0_26 = arith.constant 0 : index
      %c0_27 = arith.constant 0 : index
      %49 = vector.load %arg7[%c0_26, %c0_27] : memref<128x128xf32, #tpu.memory_space<vmem>>, vector<128x128xf32>
      %c0_28 = arith.constant 0 : index
      %c0_29 = arith.constant 0 : index
      %50 = vector.load %arg11[%c0_28, %c0_29] : memref<128x128xf32, #tpu.memory_space<vmem>>, vector<128x128xf32>
      %51 = arith.addf %49, %50 : vector<128x128xf32>
      %c0_30 = arith.constant 0 : index
      %c0_31 = arith.constant 0 : index
      %52 = vector.load %arg7[%c0_30, %c0_31] : memref<128x128xf32, #tpu.memory_space<vmem>>, vector<128x128xf32>
      tpu.vector_store %arg7[%c0_30, %c0_31], %51 {strides = array<i32>} : memref<128x128xf32, #tpu.memory_space<vmem>>, vector<128x128xf32>,
      %c0_32 = arith.constant 0 : index
      %c0_33 = arith.constant 0 : index
      %53 = vector.load %arg10[%c0_32, %c0_33] : memref<64x128xf32, #tpu.memory_space<vmem>>, vector<64x128xf32>
      %54 = arith.truncf %53 : vector<64x128xf32> to vector<64x128xbf16>
      %c0_34 = arith.constant 0 : index
      %c0_35 = arith.constant 0 : index
      %55 = vector.load %arg8[%c0_34, %c0_35] : memref<64x128xbf16, #tpu.memory_space<vmem>>, vector<64x128xbf16>
      tpu.vector_store %arg8[%c0_34, %c0_35], %54 {strides = array<i32>} : memref<64x128xbf16, #tpu.memory_space<vmem>>, vector<64x128xbf16>,
      %c0_36 = arith.constant 0 : index
      %c0_37 = arith.constant 0 : index
      %56 = vector.load %arg11[%c0_36, %c0_37] : memref<128x128xf32, #tpu.memory_space<vmem>>, vector<128x128xf32>
      %57 = arith.truncf %56 : vector<128x128xf32> to vector<128x128xbf16>
      %c0_38 = arith.constant 0 : index
      %c0_39 = arith.constant 0 : index
      %58 = vector.load %arg9[%c0_38, %c0_39] : memref<128x128xbf16, #tpu.memory_space<vmem>>, vector<128x128xbf16>
      tpu.vector_store %arg9[%c0_38, %c0_39], %57 {strides = array<i32>} : memref<128x128xbf16, #tpu.memory_space<vmem>>, vector<128x128xbf16>,
    } else {
    }
    %c2_i32 = arith.constant 2 : i32
    %38 = arith.cmpi eq, %arg0, %c2_i32 : i32
    %c0_i32_17 = arith.constant 0 : i32
    %39 = arith.cmpi eq, %arg1, %c0_i32_17 : i32
    %40 = arith.andi %38, %39 : i1
    %c0_i32_18 = arith.constant 0 : i32
    %41 = arith.cmpi eq, %arg2, %c0_i32_18 : i32
    %42 = arith.andi %40, %41 : i1
    %43 = arith.extui %42 : i1 to i32
    %c0_i32_19 = arith.constant 0 : i32
    %44 = arith.cmpi ne, %43, %c0_i32_19 : i32
    scf.if %44 {
      %c0_20 = arith.constant 0 : index
      %c0_21 = arith.constant 0 : index
      %45 = vector.load %arg6[%c0_20, %c0_21] : memref<64x128xf32, #tpu.memory_space<vmem>>, vector<64x128xf32>
      %cst_22 = arith.constant 2.500000e-01 : f32
      %46 = vector.broadcast %cst_22 : f32 to vector<64x128xf32>
      %47 = arith.mulf %45, %46 : vector<64x128xf32>
      %c0_23 = arith.constant 0 : index
      %c0_24 = arith.constant 0 : index
      %48 = vector.load %arg6[%c0_23, %c0_24] : memref<64x128xf32, #tpu.memory_space<vmem>>, vector<64x128xf32>
      tpu.vector_store %arg6[%c0_23, %c0_24], %47 {strides = array<i32>} : memref<64x128xf32, #tpu.memory_space<vmem>>, vector<64x128xf32>,
      %c0_25 = arith.constant 0 : index
      %c0_26 = arith.constant 0 : index
      %49 = vector.load %arg7[%c0_25, %c0_26] : memref<128x128xf32, #tpu.memory_space<vmem>>, vector<128x128xf32>
      %cst_27 = arith.constant 2.500000e-01 : f32
      %50 = vector.broadcast %cst_27 : f32 to vector<128x128xf32>
      %51 = arith.mulf %49, %50 : vector<128x128xf32>
      %c0_28 = arith.constant 0 : index
      %c0_29 = arith.constant 0 : index
      %52 = vector.load %arg7[%c0_28, %c0_29] : memref<128x128xf32, #tpu.memory_space<vmem>>, vector<128x128xf32>
      tpu.vector_store %arg7[%c0_28, %c0_29], %51 {strides = array<i32>} : memref<128x128xf32, #tpu.memory_space<vmem>>, vector<128x128xf32>,
    } else {
    }
    return
  }
  func.func @transform_0(%arg0: i32, %arg1: i32, %arg2: i32) -> (i32, i32) {
    %c0_i32 = arith.constant 0 : i32
    return %arg1, %arg2 : i32, i32
  }
  func.func @transform_1(%arg0: i32, %arg1: i32, %arg2: i32) -> (i32, i32) {
    %c0_i32 = arith.constant 0 : i32
    %c0_i32_0 = arith.constant 0 : i32
    %c0_i32_1 = arith.constant 0 : i32
    return %c0_i32, %c0_i32_0 : i32, i32
  }
  func.func @transform_2(%arg0: i32, %arg1: i32, %arg2: i32) -> (i32, i32) {
    %c0_i32 = arith.constant 0 : i32
    %c0_i32_0 = arith.constant 0 : i32
    %c0_i32_1 = arith.constant 0 : i32
    return %c0_i32, %c0_i32_0 : i32, i32
  }
  func.func @transform_3(%arg0: i32, %arg1: i32, %arg2: i32) -> (i32, i32) {
    %c0_i32 = arith.constant 0 : i32
    %c0_i32_0 = arith.constant 0 : i32
    %c0_i32_1 = arith.constant 0 : i32
    return %c0_i32, %c0_i32_0 : i32, i32
  }
  func.func @transform_4(%arg0: i32, %arg1: i32, %arg2: i32) -> (i32, i32) {
    %c0_i32 = arith.constant 0 : i32
    %c0_i32_0 = arith.constant 0 : i32
    %c0_i32_1 = arith.constant 0 : i32
    return %c0_i32, %c0_i32_0 : i32, i32
  }
}

</mosaic_0001>

<llo_original>
// kernel: tpu_custom_call.1
$region0: #{tpu_custom_call.1}
  #allocation0 [shape = 'u32[]', space=smem, size = 0x4, offset = 0x4, fixed_abs, tag = 'smem constant byte address 0x4 - core index']
  #allocation1 [shape = 'u32[144,128]{1,0:T(1,128)}', space=vmem, size = 0x12000, scoped, tag = 'internal scratch']
  #allocation2 [shape = 'bf16[64,128]{1,0:T(8,128)(2,1)}', space=vmem, size = 0x4000, scoped, tag = 'scratch operand']
  #allocation3 [shape = 'bf16[128,128]{1,0:T(8,128)(2,1)}', space=vmem, size = 0x8000, scoped, tag = 'scratch operand']
  #allocation4 [shape = 'f32[64,128]{1,0:T(8,128)}', space=vmem, size = 0x8000, scoped, tag = 'scratch operand']
  #allocation5 [shape = 'f32[128,128]{1,0:T(8,128)}', space=vmem, size = 0x10000, scoped, tag = 'scratch operand']
  %s0 = inlined_call_operand.hbm [shape: bf16[64,128], index: 0, kind: input, shape index: {}]
  %s1 = inlined_call_operand.hbm [shape: f32[64,128], index: 1, kind: input, shape index: {}]
  %s2 = inlined_call_operand.hbm [shape: f32[128,128], index: 2, kind: input, shape index: {}]
  %s3 = inlined_call_operand.hbm [shape: f32[64,128], index: 3, kind: output, shape index: {0}]
  %s4 = inlined_call_operand.hbm [shape: f32[128,128], index: 4, kind: output, shape index: {1}]
  %5 = xla_tuple %s3, %s4
  %s6 = sld [smem:[#allocation0]]
  $region81: #{tpu_custom_call.1} parent=0
    _
  %s8 = ssub.s32 1, %s6
  %s9 = scalar_select 0, %s8, %s6
  $region1: #{tpu_custom_call.1} parent=0
    #allocation6 [shape = 'u8[16384]{0}', space=vmem, size = 0x4000, scoped, tag = 'input window, operand 0, single buffered']
    #allocation7 [shape = 's32[2]{0}', space=sflag, size = 0x8, scoped, tag = 'scoped memory for tpu_custom_call.1']
    #allocation8 [shape = 's32[2]{0}', space=sflag, size = 0x8, scoped, tag = 'scoped memory for tpu_custom_call.1']
    #allocation9 [shape = 'u8[32768]{0}', space=vmem, size = 0x8000, scoped, tag = 'input window, operand 1, single buffered']
    #allocation10 [shape = 's32[1]{0}', space=sflag, size = 0x4, scoped, tag = 'scoped memory for tpu_custom_call.1']
    #allocation11 [shape = 'u8[65536]{0}', space=vmem, size = 0x10000, scoped, tag = 'input window, operand 2, single buffered']
    #allocation12 [shape = 'u8[32768]{0}', space=vmem, size = 0x8000, scoped, tag = 'output window, operand 0, single buffered']
    #allocation13 [shape = 'u8[65536]{0}', space=vmem, size = 0x10000, scoped, tag = 'output window, operand 1, single buffered']
    #allocation14 [shape = 's32[1]{0}', space=sflag, size = 0x4, scoped, tag = 'scoped memory for tpu_custom_call.1']
    %10 = vsyncpa [#allocation7], 0
    %11 = vsyncpa [#allocation10], 0
    %12 = vsyncpa [#allocation8], 0
    %13 = vsyncpa [#allocation14], 0
    loop: start=0, step=1, limit=5
    $region2: #{tpu_custom_call.1} parent=1 // loop_pre_header
      _
    $region3: #{tpu_custom_call.1} parent=1 // loop_header
      %s15 = sphi 0, %s19
      %p16 = scmp.ge.s32.totalorder %s15, 5
      %s22 = sphi 0, %s41
      %s23 = sphi 0, %s37
      %s24 = sphi 0, %s33
      %s25 = sphi 0, %s22
      %s26 = sphi 0, %s23
      %s27 = sphi 0, %s24
      %s28 = sphi 0, %s25
      %s29 = sphi 0, %s26
      %s30 = sphi 0, %s27
      %s46 = sphi 0, %s48
      %s49 = sphi 0, %s46
      %s50 = sphi 0, %s49
      %s66 = sphi 0, %s50
      %s70 = sphi 0, %s70
      %s72 = sphi 0, %s70
      %s73 = sphi 0, %s72
      %s87 = sphi 0, %s73
      %s91 = sphi 0, %s91
      %s93 = sphi 0, %s91
      %s94 = sphi 0, %s93
      %s108 = sphi 0, %s94
      %s112 = sphi 0, %s112
      %s114 = sphi 0, %s112
      %s115 = sphi 0, %s114
      %s129 = sphi 0, %s115
      %s133 = sphi 0, %s133
      %s135 = sphi 0, %s133
      %s136 = sphi 0, %s135
      %s150 = sphi 0, %s136
    $region4: #{tpu_custom_call.1} parent=1 // loop_header_branch
      %18 = sbr.rel (%p16) target = $region8
    $region5: #{tpu_custom_call.1} parent=1 // loop_body
      %s20 = ssub.s32 %s15, 1
      %s21 = ssub.s32 %s15, 2
      %s31 = sadd.s32 1, %s24
      %p32 = scmp.ge.s32.totalorder %s31, 1
      %s33 = scalar_select %p32, 0, %s31
      %s34 = sadd.s32 1, %s23
      %s35 = scalar_select %p32, %s34, %s23
      %p36 = scmp.ge.s32.totalorder %s35, 1
      %s37 = scalar_select %p36, 0, %s35
      %s38 = sadd.s32 1, %s22
      %s39 = scalar_select %p36, %s38, %s22
      %p40 = scmp.ge.s32.totalorder %s39, 3
      %s41 = scalar_select %p40, 0, %s39
      %s42 = ssub.s32 %s23, %s37
      %s43 = ssub.s32 %s24, %s33
      %s44 = sor.u32 %s42, %s43
      %p45 = scmp.eq.s32.totalorder %s44, 0
      %s47 = sadd.s32 %s46, 1
      %s48 = scalar_select %p45, %s46, %s47
      %p51 = pneg %p45
      %p52 = scmp.eq.s32.totalorder %s15, 2
      %p53 = por %p51, %p52
      %p54 = scmp.ne.s32.totalorder %s46, %s49
      %p55 = scmp.eq.s32.totalorder %s15, 0
      %p56 = por %p54, %p55
      %p57 = scmp.ne.s32.totalorder %s46, %s49
      %p58 = scmp.eq.s32.totalorder %s20, 2
      %p59 = por %p57, %p58
      %p60 = scmp.ne.s32.totalorder %s49, %s50
      %p61 = scmp.eq.s32.totalorder %s20, 0
      %p62 = por %p60, %p61
      %p63 = scmp.ne.s32.totalorder %s49, %s50
      %p64 = scmp.eq.s32.totalorder %s21, 2
      %p65 = por %p63, %p64
      %p67 = scmp.ne.s32.totalorder %s50, %s66
      %p68 = scmp.eq.s32.totalorder %s21, 0
      %p69 = por %p67, %p68
      %s71 = sadd.s32 %s70, 1
      %p74 = scmp.eq.s32.totalorder %s15, 2
      %p75 = scmp.ne.s32.totalorder %s70, %s72
      %p76 = scmp.eq.s32.totalorder %s15, 0
      %p77 = por %p75, %p76
      %p78 = scmp.ne.s32.totalorder %s70, %s72
      %p79 = scmp.eq.s32.totalorder %s20, 2
      %p80 = por %p78, %p79
      %p81 = scmp.ne.s32.totalorder %s72, %s73
      %p82 = scmp.eq.s32.totalorder %s20, 0
      %p83 = por %p81, %p82
      %p84 = scmp.ne.s32.totalorder %s72, %s73
      %p85 = scmp.eq.s32.totalorder %s21, 2
      %p86 = por %p84, %p85
      %p88 = scmp.ne.s32.totalorder %s73, %s87
      %p89 = scmp.eq.s32.totalorder %s21, 0
      %p90 = por %p88, %p89
      %s92 = sadd.s32 %s91, 1
      %p95 = scmp.eq.s32.totalorder %s15, 2
      %p96 = scmp.ne.s32.totalorder %s91, %s93
      %p97 = scmp.eq.s32.totalorder %s15, 0
      %p98 = por %p96, %p97
      %p99 = scmp.ne.s32.totalorder %s91, %s93
      %p100 = scmp.eq.s32.totalorder %s20, 2
      %p101 = por %p99, %p100
      %p102 = scmp.ne.s32.totalorder %s93, %s94
      %p103 = scmp.eq.s32.totalorder %s20, 0
      %p104 = por %p102, %p103
      %p105 = scmp.ne.s32.totalorder %s93, %s94
      %p106 = scmp.eq.s32.totalorder %s21, 2
      %p107 = por %p105, %p106
      %p109 = scmp.ne.s32.totalorder %s94, %s108
      %p110 = scmp.eq.s32.totalorder %s21, 0
      %p111 = por %p109, %p110
      %s113 = sadd.s32 %s112, 1
      %p116 = scmp.eq.s32.totalorder %s15, 2
      %p117 = scmp.ne.s32.totalorder %s112, %s114
      %p118 = scmp.eq.s32.totalorder %s15, 0
      %p119 = por %p117, %p118
      %p120 = scmp.ne.s32.totalorder %s112, %s114
      %p121 = scmp.eq.s32.totalorder %s20, 2
      %p122 = por %p120, %p121
      %p123 = scmp.ne.s32.totalorder %s114, %s115
      %p124 = scmp.eq.s32.totalorder %s20, 0
      %p125 = por %p123, %p124
      %p126 = scmp.ne.s32.totalorder %s114, %s115
      %p127 = scmp.eq.s32.totalorder %s21, 2
      %p128 = por %p126, %p127
      %p130 = scmp.ne.s32.totalorder %s115, %s129
      %p131 = scmp.eq.s32.totalorder %s21, 0
      %p132 = por %p130, %p131
      %s134 = sadd.s32 %s133, 1
      %p137 = scmp.eq.s32.totalorder %s15, 2
      %p138 = scmp.ne.s32.totalorder %s133, %s135
      %p139 = scmp.eq.s32.totalorder %s15, 0
      %p140 = por %p138, %p139
      %p141 = scmp.ne.s32.totalorder %s133, %s135
      %p142 = scmp.eq.s32.totalorder %s20, 2
      %p143 = por %p141, %p142
      %p144 = scmp.ne.s32.totalorder %s135, %s136
      %p145 = scmp.eq.s32.totalorder %s20, 0
      %p146 = por %p144, %p145
      %p147 = scmp.ne.s32.totalorder %s135, %s136
      %p148 = scmp.eq.s32.totalorder %s21, 2
      %p149 = por %p147, %p148
      %p151 = scmp.ne.s32.totalorder %s136, %s150
      %p152 = scmp.eq.s32.totalorder %s21, 0
      %p153 = por %p151, %p152
      %p154 = scmp.le.s32.totalorder 1, %s15
      %p155 = scmp.lt.s32.totalorder %s15, 4
      %p156 = pnand %p154, %p155
      %p157 = pneg %p156
      // Predicated region
      $region9: #{tpu_custom_call.1} parent=5 // pred_check
        _
      $region10: #{tpu_custom_call.1} parent=5 // pred_check_branch
        %159 = sbr.rel (%p156) target = $region12
      $region11: #{tpu_custom_call.1} parent=5 // pred_region
        %s160 = ssub.s32 %s15, 1
        // Predicated region
        $region13: #{tpu_custom_call.1} parent=11 // pred_check
          %p161 = pneg %p62
        $region14: #{tpu_custom_call.1} parent=11 // pred_check_branch
          %163 = sbr.rel (%p161) target = $region16
        $region15: #{tpu_custom_call.1} parent=11 // pred_region
          %s164 = smul.u32 8, %s26
          %s166 = ssub.s32 512, 512
          %167 = vsyncadd [#allocation7], %s166
          %s168 = sadd.s32 %s27, %s164
          %s169 = smul.addr %s168, 64
          %s170 = scalar_lea.hbm %s0, %s169
          %s171 = sshll.u32 [#allocation6], 4
          %s172 = int_to_ptr.vmem [resolvable:$true] %s171
          %177 = dma.hbm_to_vmem [thread:$0]  %s170, 512, %s172, [#allocation7], 64, 64, 4
        $region16: #{tpu_custom_call.1} parent=11 // pred_fallthru
          _
        // Predicated region
        $region17: #{tpu_custom_call.1} parent=11 // pred_check
          %p178 = pneg %p83
        $region18: #{tpu_custom_call.1} parent=11 // pred_check_branch
          %180 = sbr.rel (%p178) target = $region20
        $region19: #{tpu_custom_call.1} parent=11 // pred_region
          %s182 = ssub.s32 1024, 1024
          %183 = vsyncadd [#allocation10], %s182
          %s184 = sshll.u32 [#allocation9], 4
          %s185 = int_to_ptr.vmem [resolvable:$true] %s184
          %190 = dma.hbm_to_vmem [thread:$0]  %s1, 1024, %s185, [#allocation10], 128, 128, 8
        $region20: #{tpu_custom_call.1} parent=11 // pred_fallthru
          _
        // Predicated region
        $region21: #{tpu_custom_call.1} parent=11 // pred_check
          %p191 = pneg %p104
        $region22: #{tpu_custom_call.1} parent=11 // pred_check_branch
          %193 = sbr.rel (%p191) target = $region24
        $region23: #{tpu_custom_call.1} parent=11 // pred_region
          %s195 = ssub.s32 2048, 2048
          %196 = vsyncadd [#allocation10], %s195
          %s197 = sshll.u32 [#allocation11], 4
          %s198 = int_to_ptr.vmem [resolvable:$true] %s197
          %203 = dma.hbm_to_vmem [thread:$0]  %s2, 2048, %s198, [#allocation10], 128, 128, 8
        $region24: #{tpu_custom_call.1} parent=11 // pred_fallthru
          _
      $region12: #{tpu_custom_call.1} parent=5 // pred_fallthru
        _
      %p204 = scmp.lt.s32.totalorder %s15, 3
      // Predicated region
      $region25: #{tpu_custom_call.1} parent=5 // pred_check
        %p205 = pneg %p204
      $region26: #{tpu_custom_call.1} parent=5 // pred_check_branch
        %207 = sbr.rel (%p205) target = $region28
      $region27: #{tpu_custom_call.1} parent=5 // pred_region
        _
      $region28: #{tpu_custom_call.1} parent=5 // pred_fallthru
        _
      %p208 = scmp.le.s32.totalorder 1, %s15
      %p209 = scmp.lt.s32.totalorder %s15, 4
      %p210 = pnand %p208, %p209
      %p211 = pneg %p210
      // Predicated region
      $region29: #{tpu_custom_call.1} parent=5 // pred_check
        _
      $region30: #{tpu_custom_call.1} parent=5 // pred_check_branch
        %213 = sbr.rel (%p210) target = $region32
      $region31: #{tpu_custom_call.1} parent=5 // pred_region
        %s214 = ssub.s32 %s15, 1
        // Predicated region
        $region33: #{tpu_custom_call.1} parent=31 // pred_check
          %p215 = pneg %p62
        $region34: #{tpu_custom_call.1} parent=31 // pred_check_branch
          %217 = sbr.rel (%p215) target = $region36
        $region35: #{tpu_custom_call.1} parent=31 // pred_region
          %218 = dma.done [#allocation7], 512
        $region36: #{tpu_custom_call.1} parent=31 // pred_fallthru
          _
        // Predicated region
        $region37: #{tpu_custom_call.1} parent=31 // pred_check
          %p219 = pneg %p83
        $region38: #{tpu_custom_call.1} parent=31 // pred_check_branch
          %221 = sbr.rel (%p219) target = $region40
        $region39: #{tpu_custom_call.1} parent=31 // pred_region
          %222 = dma.done [#allocation10], 1024
        $region40: #{tpu_custom_call.1} parent=31 // pred_fallthru
          _
        // Predicated region
        $region41: #{tpu_custom_call.1} parent=31 // pred_check
          %p223 = pneg %p104
        $region42: #{tpu_custom_call.1} parent=31 // pred_check_branch
          %225 = sbr.rel (%p223) target = $region44
        $region43: #{tpu_custom_call.1} parent=31 // pred_region
          %226 = dma.done [#allocation10], 2048
        $region44: #{tpu_custom_call.1} parent=31 // pred_fallthru
          _
        %p227 = pneg %p62
        %p228 = pneg %p59
        %p229 = pneg %p83
        %p230 = pneg %p80
        %p231 = pneg %p104
        %p232 = pneg %p101
        %p233 = pneg %p125
        %p234 = pneg %p122
        %p235 = pneg %p146
        %p236 = pneg %p143
        %s237 = smul.u32 8, %s26
        %p239 = scmp.eq.s32.totalorder %s25, 0
        %p240 = scmp.eq.s32.totalorder %s26, 0
        %p241 = pnand %p239, %p240
        %p242 = pneg %p241
        %p243 = scmp.eq.s32.totalorder %s27, 0
        %p244 = pnand %p242, %p243
        %p245 = pneg %p244
        // Predicated region
        $region45: #{tpu_custom_call.1} parent=31 // pred_check
          _
        $region46: #{tpu_custom_call.1} parent=31 // pred_check_branch
          %247 = sbr.rel (%p244) target = $region48
        $region47: #{tpu_custom_call.1} parent=31 // pred_region
          %v248 = vld [vmem:[#allocation9] sm:$0xff]
          %v249 = vld [vmem:[#allocation9 + $0x8] sm:$0xff]
          %v250 = vld [vmem:[#allocation9 + $0x10] sm:$0xff]
          %v251 = vld [vmem:[#allocation9 + $0x18] sm:$0xff]
          %v252 = vld [vmem:[#allocation9 + $0x20] sm:$0xff]
          %v253 = vld [vmem:[#allocation9 + $0x28] sm:$0xff]
          %v254 = vld [vmem:[#allocation9 + $0x30] sm:$0xff]
          %v255 = vld [vmem:[#allocation9 + $0x38] sm:$0xff]
          %256 = vst [vmem:[#allocation12] sm:$0xff] %v248
          %257 = vst [vmem:[#allocation12 + $0x8] sm:$0xff] %v249
          %258 = vst [vmem:[#allocation12 + $0x10] sm:$0xff] %v250
          %259 = vst [vmem:[#allocation12 + $0x18] sm:$0xff] %v251
          %260 = vst [vmem:[#allocation12 + $0x20] sm:$0xff] %v252
          %261 = vst [vmem:[#allocation12 + $0x28] sm:$0xff] %v253
          %262 = vst [vmem:[#allocation12 + $0x30] sm:$0xff] %v254
          %263 = vst [vmem:[#allocation12 + $0x38] sm:$0xff] %v255
          %v264 = vld [vmem:[#allocation11] sm:$0xff]
          %v265 = vld [vmem:[#allocation11 + $0x8] sm:$0xff]
          %v266 = vld [vmem:[#allocation11 + $0x10] sm:$0xff]
          %v267 = vld [vmem:[#allocation11 + $0x18] sm:$0xff]
          %v268 = vld [vmem:[#allocation11 + $0x20] sm:$0xff]
          %v269 = vld [vmem:[#allocation11 + $0x28] sm:$0xff]
          %v270 = vld [vmem:[#allocation11 + $0x30] sm:$0xff]
          %v271 = vld [vmem:[#allocation11 + $0x38] sm:$0xff]
          %v272 = vld [vmem:[#allocation11 + $0x40] sm:$0xff]
          %v273 = vld [vmem:[#allocation11 + $0x48] sm:$0xff]
          %v274 = vld [vmem:[#allocation11 + $0x50] sm:$0xff]
          %v275 = vld [vmem:[#allocation11 + $0x58] sm:$0xff]
          %v276 = vld [vmem:[#allocation11 + $0x60] sm:$0xff]
          %v277 = vld [vmem:[#allocation11 + $0x68] sm:$0xff]
          %v278 = vld [vmem:[#allocation11 + $0x70] sm:$0xff]
          %v279 = vld [vmem:[#allocation11 + $0x78] sm:$0xff]
          %280 = vst [vmem:[#allocation13] sm:$0xff] %v264
          %281 = vst [vmem:[#allocation13 + $0x8] sm:$0xff] %v265
          %282 = vst [vmem:[#allocation13 + $0x10] sm:$0xff] %v266
          %283 = vst [vmem:[#allocation13 + $0x18] sm:$0xff] %v267
          %284 = vst [vmem:[#allocation13 + $0x20] sm:$0xff] %v268
          %285 = vst [vmem:[#allocation13 + $0x28] sm:$0xff] %v269
          %286 = vst [vmem:[#allocation13 + $0x30] sm:$0xff] %v270
          %287 = vst [vmem:[#allocation13 + $0x38] sm:$0xff] %v271
          %288 = vst [vmem:[#allocation13 + $0x40] sm:$0xff] %v272
          %289 = vst [vmem:[#allocation13 + $0x48] sm:$0xff] %v273
          %290 = vst [vmem:[#allocation13 + $0x50] sm:$0xff] %v274
          %291 = vst [vmem:[#allocation13 + $0x58] sm:$0xff] %v275
          %292 = vst [vmem:[#allocation13 + $0x60] sm:$0xff] %v276
          %293 = vst [vmem:[#allocation13 + $0x68] sm:$0xff] %v277
          %294 = vst [vmem:[#allocation13 + $0x70] sm:$0xff] %v278
          %295 = vst [vmem:[#allocation13 + $0x78] sm:$0xff] %v279
          %v296 = vld [vmem:[#allocation9] sm:$0xff]
          %v297 = vld [vmem:[#allocation9 + $0x8] sm:$0xff]
          %v298 = vld [vmem:[#allocation9 + $0x10] sm:$0xff]
          %v299 = vld [vmem:[#allocation9 + $0x18] sm:$0xff]
          %v300 = vld [vmem:[#allocation9 + $0x20] sm:$0xff]
          %v301 = vld [vmem:[#allocation9 + $0x28] sm:$0xff]
          %v302 = vld [vmem:[#allocation9 + $0x30] sm:$0xff]
          %v303 = vld [vmem:[#allocation9 + $0x38] sm:$0xff]
          %v304 = vpack.c.bf16 %v297, %v296
          %v305 = vpack.c.bf16 %v299, %v298
          %v306 = vpack.c.bf16 %v301, %v300
          %v307 = vpack.c.bf16 %v303, %v302
          %v312 = vunpack.c.l.b16 %v304
          %v313 = vunpack.c.h.b16 %v304
          %v314 = vunpack.c.l.b16 %v305
          %v315 = vunpack.c.h.b16 %v305
          %v316 = vunpack.c.l.b16 %v306
          %v317 = vunpack.c.h.b16 %v306
          %v318 = vunpack.c.l.b16 %v307
          %v319 = vunpack.c.h.b16 %v307
          %v320 = vpack.c.b16 %v312, %v312
          %v321 = vpack.c.b16 %v313, %v313
          %v322 = vpack.c.b16 %v314, %v314
          %v323 = vpack.c.b16 %v315, %v315
          %v324 = vpack.c.b16 %v316, %v316
          %v325 = vpack.c.b16 %v317, %v317
          %v326 = vpack.c.b16 %v318, %v318
          %v327 = vpack.c.b16 %v319, %v319
          %336 = vst [vmem:[#allocation2] sm:$0xf] %v320
          %337 = vst [vmem:[#allocation2 + $0x4] sm:$0xf] %v321
          %338 = vst [vmem:[#allocation2 + $0x8] sm:$0xf] %v322
          %339 = vst [vmem:[#allocation2 + $0xc] sm:$0xf] %v323
          %340 = vst [vmem:[#allocation2 + $0x10] sm:$0xf] %v324
          %341 = vst [vmem:[#allocation2 + $0x14] sm:$0xf] %v325
          %342 = vst [vmem:[#allocation2 + $0x18] sm:$0xf] %v326
          %343 = vst [vmem:[#allocation2 + $0x1c] sm:$0xf] %v327
          %v344 = vld [vmem:[#allocation11] sm:$0xff]
          %v345 = vld [vmem:[#allocation11 + $0x8] sm:$0xff]
          %v346 = vld [vmem:[#allocation11 + $0x10] sm:$0xff]
          %v347 = vld [vmem:[#allocation11 + $0x18] sm:$0xff]
          %v348 = vld [vmem:[#allocation11 + $0x20] sm:$0xff]
          %v349 = vld [vmem:[#allocation11 + $0x28] sm:$0xff]
          %v350 = vld [vmem:[#allocation11 + $0x30] sm:$0xff]
          %v351 = vld [vmem:[#allocation11 + $0x38] sm:$0xff]
          %v352 = vld [vmem:[#allocation11 + $0x40] sm:$0xff]
          %v353 = vld [vmem:[#allocation11 + $0x48] sm:$0xff]
          %v354 = vld [vmem:[#allocation11 + $0x50] sm:$0xff]
          %v355 = vld [vmem:[#allocation11 + $0x58] sm:$0xff]
          %v356 = vld [vmem:[#allocation11 + $0x60] sm:$0xff]
          %v357 = vld [vmem:[#allocation11 + $0x68] sm:$0xff]
          %v358 = vld [vmem:[#allocation11 + $0x70] sm:$0xff]
          %v359 = vld [vmem:[#allocation11 + $0x78] sm:$0xff]
          %v360 = vpack.c.bf16 %v345, %v344
          %v361 = vpack.c.bf16 %v347, %v346
          %v362 = vpack.c.bf16 %v349, %v348
          %v363 = vpack.c.bf16 %v351, %v350
          %v364 = vpack.c.bf16 %v353, %v352
          %v365 = vpack.c.bf16 %v355, %v354
          %v366 = vpack.c.bf16 %v357, %v356
          %v367 = vpack.c.bf16 %v359, %v358
          %v376 = vunpack.c.l.b16 %v360
          %v377 = vunpack.c.h.b16 %v360
          %v378 = vunpack.c.l.b16 %v361
          %v379 = vunpack.c.h.b16 %v361
          %v380 = vunpack.c.l.b16 %v362
          %v381 = vunpack.c.h.b16 %v362
          %v382 = vunpack.c.l.b16 %v363
          %v383 = vunpack.c.h.b16 %v363
          %v384 = vunpack.c.l.b16 %v364
          %v385 = vunpack.c.h.b16 %v364
          %v386 = vunpack.c.l.b16 %v365
          %v387 = vunpack.c.h.b16 %v365
          %v388 = vunpack.c.l.b16 %v366
          %v389 = vunpack.c.h.b16 %v366
          %v390 = vunpack.c.l.b16 %v367
          %v391 = vunpack.c.h.b16 %v367
          %v392 = vpack.c.b16 %v376, %v376
          %v393 = vpack.c.b16 %v377, %v377
          %v394 = vpack.c.b16 %v378, %v378
          %v395 = vpack.c.b16 %v379, %v379
          %v396 = vpack.c.b16 %v380, %v380
          %v397 = vpack.c.b16 %v381, %v381
          %v398 = vpack.c.b16 %v382, %v382
          %v399 = vpack.c.b16 %v383, %v383
          %v400 = vpack.c.b16 %v384, %v384
          %v401 = vpack.c.b16 %v385, %v385
          %v402 = vpack.c.b16 %v386, %v386
          %v403 = vpack.c.b16 %v387, %v387
          %v404 = vpack.c.b16 %v388, %v388
          %v405 = vpack.c.b16 %v389, %v389
          %v406 = vpack.c.b16 %v390, %v390
          %v407 = vpack.c.b16 %v391, %v391
          %424 = vst [vmem:[#allocation3] sm:$0xf] %v392
          %425 = vst [vmem:[#allocation3 + $0x4] sm:$0xf] %v393
          %426 = vst [vmem:[#allocation3 + $0x8] sm:$0xf] %v394
          %427 = vst [vmem:[#allocation3 + $0xc] sm:$0xf] %v395
          %428 = vst [vmem:[#allocation3 + $0x10] sm:$0xf] %v396
          %429 = vst [vmem:[#allocation3 + $0x14] sm:$0xf] %v397
          %430 = vst [vmem:[#allocation3 + $0x18] sm:$0xf] %v398
          %431 = vst [vmem:[#allocation3 + $0x1c] sm:$0xf] %v399
          %432 = vst [vmem:[#allocation3 + $0x20] sm:$0xf] %v400
          %433 = vst [vmem:[#allocation3 + $0x24] sm:$0xf] %v401
          %434 = vst [vmem:[#allocation3 + $0x28] sm:$0xf] %v402
          %435 = vst [vmem:[#allocation3 + $0x2c] sm:$0xf] %v403
          %436 = vst [vmem:[#allocation3 + $0x30] sm:$0xf] %v404
          %437 = vst [vmem:[#allocation3 + $0x34] sm:$0xf] %v405
          %438 = vst [vmem:[#allocation3 + $0x38] sm:$0xf] %v406
          %439 = vst [vmem:[#allocation3 + $0x3c] sm:$0xf] %v407
        $region48: #{tpu_custom_call.1} parent=31 // pred_fallthru
          _
        %p440 = pnand %p240, %p243
        %p441 = pneg %p440
        // Predicated region
        $region49: #{tpu_custom_call.1} parent=31 // pred_check
          _
        $region50: #{tpu_custom_call.1} parent=31 // pred_check_branch
          %443 = sbr.rel (%p440) target = $region52
        $region51: #{tpu_custom_call.1} parent=31 // pred_region
          %444 = vst [vmem:[#allocation4] sm:$0xff] 0.0
          %445 = vst [vmem:[#allocation4 + $0x8] sm:$0xff] 0.0
          %446 = vst [vmem:[#allocation4 + $0x10] sm:$0xff] 0.0
          %447 = vst [vmem:[#allocation4 + $0x18] sm:$0xff] 0.0
          %448 = vst [vmem:[#allocation4 + $0x20] sm:$0xff] 0.0
          %449 = vst [vmem:[#allocation4 + $0x28] sm:$0xff] 0.0
          %450 = vst [vmem:[#allocation4 + $0x30] sm:$0xff] 0.0
          %451 = vst [vmem:[#allocation4 + $0x38] sm:$0xff] 0.0
          %452 = vst [vmem:[#allocation5] sm:$0xff] 0.0
          %453 = vst [vmem:[#allocation5 + $0x8] sm:$0xff] 0.0
          %454 = vst [vmem:[#allocation5 + $0x10] sm:$0xff] 0.0
          %455 = vst [vmem:[#allocation5 + $0x18] sm:$0xff] 0.0
          %456 = vst [vmem:[#allocation5 + $0x20] sm:$0xff] 0.0
          %457 = vst [vmem:[#allocation5 + $0x28] sm:$0xff] 0.0
          %458 = vst [vmem:[#allocation5 + $0x30] sm:$0xff] 0.0
          %459 = vst [vmem:[#allocation5 + $0x38] sm:$0xff] 0.0
          %460 = vst [vmem:[#allocation5 + $0x40] sm:$0xff] 0.0
          %461 = vst [vmem:[#allocation5 + $0x48] sm:$0xff] 0.0
          %462 = vst [vmem:[#allocation5 + $0x50] sm:$0xff] 0.0
          %463 = vst [vmem:[#allocation5 + $0x58] sm:$0xff] 0.0
          %464 = vst [vmem:[#allocation5 + $0x60] sm:$0xff] 0.0
          %465 = vst [vmem:[#allocation5 + $0x68] sm:$0xff] 0.0
          %466 = vst [vmem:[#allocation5 + $0x70] sm:$0xff] 0.0
          %467 = vst [vmem:[#allocation5 + $0x78] sm:$0xff] 0.0
        $region52: #{tpu_custom_call.1} parent=31 // pred_fallthru
          _
        %s468 = smul.u32 %s26, 64
        %s469 = smul.u32 %s27, 128
        %v470 = vld [vmem:[#allocation6] sm:$0xf]
        %v471 = vld [vmem:[#allocation6 + $0x4] sm:$0xf]
        %v472 = vld [vmem:[#allocation6 + $0x8] sm:$0xf]
        %v473 = vld [vmem:[#allocation6 + $0xc] sm:$0xf]
        %v474 = vld [vmem:[#allocation6 + $0x10] sm:$0xf]
        %v475 = vld [vmem:[#allocation6 + $0x14] sm:$0xf]
        %v476 = vld [vmem:[#allocation6 + $0x18] sm:$0xf]
        %v477 = vld [vmem:[#allocation6 + $0x1c] sm:$0xf]
        %s478 = sshra.s32 %s469, 3
        %s479 = sand.u32 %s469, 7
        %s480 = smul.addr %s478, 4
        %s481 = scalar_lea.vmem [#allocation3], %s480
        %v482 = vld [vmem:[%s481] sm:$0xf]
        %v483 = vld [vmem:[%s481 + $0x4] sm:$0xf]
        %v484 = vld [vmem:[%s481 + $0x8] sm:$0xf]
        %v485 = vld [vmem:[%s481 + $0xc] sm:$0xf]
        %v486 = vld [vmem:[%s481 + $0x10] sm:$0xf]
        %v487 = vld [vmem:[%s481 + $0x14] sm:$0xf]
        %v488 = vld [vmem:[%s481 + $0x18] sm:$0xf]
        %v489 = vld [vmem:[%s481 + $0x1c] sm:$0xf]
        %v490 = vld [vmem:[%s481 + $0x20] sm:$0xf]
        %v491 = vld [vmem:[%s481 + $0x24] sm:$0xf]
        %v492 = vld [vmem:[%s481 + $0x28] sm:$0xf]
        %v493 = vld [vmem:[%s481 + $0x2c] sm:$0xf]
        %v494 = vld [vmem:[%s481 + $0x30] sm:$0xf]
        %v495 = vld [vmem:[%s481 + $0x34] sm:$0xf]
        %v496 = vld [vmem:[%s481 + $0x38] sm:$0xf]
        %v497 = vld [vmem:[%s481 + $0x3c] sm:$0xf]
        %s498 = sshra.s32 %s468, 3
        %s499 = sand.u32 %s468, 7
        %s500 = smul.addr %s498, 4
        %s501 = scalar_lea.vmem [#allocation2], %s500
        %v502 = vld [vmem:[%s501] sm:$0xf]
        %v503 = vld [vmem:[%s501 + $0x4] sm:$0xf]
        %v504 = vld [vmem:[%s501 + $0x8] sm:$0xf]
        %v505 = vld [vmem:[%s501 + $0xc] sm:$0xf]
        %v506 = vld [vmem:[%s501 + $0x10] sm:$0xf]
        %v507 = vld [vmem:[%s501 + $0x14] sm:$0xf]
        %v508 = vld [vmem:[%s501 + $0x18] sm:$0xf]
        %v509 = vld [vmem:[%s501 + $0x1c] sm:$0xf]
        %s510 = scalar_lea.vmem [#allocation4], %s468
        %v511 = vld [vmem:[%s510] sm:$0xff]
        %v512 = vld [vmem:[%s510 + $0x8] sm:$0xff]
        %v513 = vld [vmem:[%s510 + $0x10] sm:$0xff]
        %v514 = vld [vmem:[%s510 + $0x18] sm:$0xff]
        %v515 = vld [vmem:[%s510 + $0x20] sm:$0xff]
        %v516 = vld [vmem:[%s510 + $0x28] sm:$0xff]
        %v517 = vld [vmem:[%s510 + $0x30] sm:$0xff]
        %v518 = vld [vmem:[%s510 + $0x38] sm:$0xff]
        %v527 = vunpack.c.l.b16 %v470
        %v528 = vunpack.c.l.b16 %v471
        %v529 = vunpack.c.l.b16 %v472
        %v530 = vunpack.c.l.b16 %v473
        %v531 = vunpack.c.l.b16 %v474
        %v532 = vunpack.c.l.b16 %v475
        %v533 = vunpack.c.l.b16 %v476
        %v534 = vunpack.c.l.b16 %v477
        %v535 = vpack.c.b16 %v528, %v527
        %v536 = vpack.c.b16 %v530, %v529
        %v537 = vpack.c.b16 %v532, %v531
        %v538 = vpack.c.b16 %v534, %v533
        %v559 = vunpack.c.l.b16 %v482
        %v560 = vunpack.c.l.b16 %v483
        %v561 = vunpack.c.l.b16 %v484
        %v562 = vunpack.c.l.b16 %v485
        %v563 = vunpack.c.l.b16 %v486
        %v564 = vunpack.c.l.b16 %v487
        %v565 = vunpack.c.l.b16 %v488
        %v566 = vunpack.c.l.b16 %v489
        %v567 = vunpack.c.l.b16 %v490
        %v568 = vunpack.c.l.b16 %v491
        %v569 = vunpack.c.l.b16 %v492
        %v570 = vunpack.c.l.b16 %v493
        %v571 = vunpack.c.l.b16 %v494
        %v572 = vunpack.c.l.b16 %v495
        %v573 = vunpack.c.l.b16 %v496
        %v574 = vunpack.c.l.b16 %v497
        %v575 = vpack.c.b16 %v560, %v559
        %v576 = vpack.c.b16 %v562, %v561
        %v577 = vpack.c.b16 %v564, %v563
        %v578 = vpack.c.b16 %v566, %v565
        %v579 = vpack.c.b16 %v568, %v567
        %v580 = vpack.c.b16 %v570, %v569
        %v581 = vpack.c.b16 %v572, %v571
        %v582 = vpack.c.b16 %v574, %v573
        %591 = vmatprep.subr.bf16.mxu0 0
        %592 = vmatpush1.bf16.msra.mxu0 %v582
        %593 = vmatprep.subr.bf16.mxu0 0
        %594 = vmatpush1.bf16.msra.mxu0 %v581
        %595 = vmatprep.subr.bf16.mxu0 0
        %596 = vmatpush1.bf16.msra.mxu0 %v580
        %597 = vmatprep.subr.bf16.mxu0 0
        %598 = vmatpush1.bf16.msra.mxu0 %v579
        %599 = vmatprep.subr.bf16.mxu0 0
        %600 = vmatpush1.bf16.msra.mxu0 %v578
        %601 = vmatprep.subr.bf16.mxu0 0
        %602 = vmatpush1.bf16.msra.mxu0 %v577
        %603 = vmatprep.subr.bf16.mxu0 0
        %604 = vmatpush1.bf16.msra.mxu0 %v576
        %605 = vmatprep.subr.bf16.mxu0 0
        %606 = vmatpush1.bf16.msra.mxu0 %v575
        %607 = vmatprep.subr.bf16.mxu0 0
        %608 = vmatpush2.bf16.msra.mxu0 0
        %609 = vmatprep.subr.bf16.mxu0 0
        %610 = vmatpush2.bf16.msra.mxu0 0
        %611 = vmatprep.subr.bf16.mxu0 0
        %612 = vmatpush2.bf16.msra.mxu0 0
        %613 = vmatprep.subr.bf16.mxu0 0
        %614 = vmatpush2.bf16.msra.mxu0 0
        %615 = vmatprep.subr.bf16.mxu0 0
        %616 = vmatpush2.bf16.msra.mxu0 0
        %617 = vmatprep.subr.bf16.mxu0 0
        %618 = vmatpush2.bf16.msra.mxu0 0
        %619 = vmatprep.subr.bf16.mxu0 0
        %620 = vmatpush2.bf16.msra.mxu0 0
        %621 = vmatprep.subr.bf16.mxu0 0
        %622 = vmatpush2.bf16.msra.mxu0 0
        %623 = vmatprep.mubr.bf16.mxu0 0
        %624 = vmatmul.mubr.bf16.gmra.mxu0 %v535
        %v625 = vpop.f32.mrf.mxu0
        %v626 = vadd.f32 0.0, %v625
        %v627 = vpop.f32.mrf.mxu0
        %v628 = vpop.f32.mrf.mxu0
        %v629 = vadd.f32 0.0, %v628
        %v630 = vpop.f32.mrf.mxu0
        %631 = vmatprep.mubr.bf16.mxu0 0
        %632 = vmatmul.mubr.bf16.gmra.mxu0 %v536
        %v633 = vpop.f32.mrf.mxu0
        %v634 = vadd.f32 0.0, %v633
        %v635 = vpop.f32.mrf.mxu0
        %v636 = vpop.f32.mrf.mxu0
        %v637 = vadd.f32 0.0, %v636
        %v638 = vpop.f32.mrf.mxu0
        %639 = vmatprep.mubr.bf16.mxu0 0
        %640 = vmatmul.mubr.bf16.gmra.mxu0 %v537
        %v641 = vpop.f32.mrf.mxu0
        %v642 = vadd.f32 0.0, %v641
        %v643 = vpop.f32.mrf.mxu0
        %v644 = vpop.f32.mrf.mxu0
        %v645 = vadd.f32 0.0, %v644
        %v646 = vpop.f32.mrf.mxu0
        %647 = vmatprep.mubr.bf16.mxu0 0
        %648 = vmatmul.mubr.bf16.gmra.mxu0 %v538
        %v649 = vpop.f32.mrf.mxu0
        %v650 = vadd.f32 0.0, %v649
        %v651 = vpop.f32.mrf.mxu0
        %v652 = vpop.f32.mrf.mxu0
        %v653 = vadd.f32 0.0, %v652
        %v654 = vpop.f32.mrf.mxu0
        %655 = vdwg.mxu0
        %v656 = vadd.f32 %v511, %v626
        %v657 = vadd.f32 %v512, %v629
        %v658 = vadd.f32 %v513, %v634
        %v659 = vadd.f32 %v514, %v637
        %v660 = vadd.f32 %v515, %v642
        %v661 = vadd.f32 %v516, %v645
        %v662 = vadd.f32 %v517, %v650
        %v663 = vadd.f32 %v518, %v653
        %664 = vst [vmem:[%s510] sm:$0xff] %v656
        %665 = vst [vmem:[%s510 + $0x8] sm:$0xff] %v657
        %666 = vst [vmem:[%s510 + $0x10] sm:$0xff] %v658
        %667 = vst [vmem:[%s510 + $0x18] sm:$0xff] %v659
        %668 = vst [vmem:[%s510 + $0x20] sm:$0xff] %v660
        %669 = vst [vmem:[%s510 + $0x28] sm:$0xff] %v661
        %670 = vst [vmem:[%s510 + $0x30] sm:$0xff] %v662
        %671 = vst [vmem:[%s510 + $0x38] sm:$0xff] %v663
        %s672 = scalar_lea.vmem [#allocation5], %s469
        %v673 = vld [vmem:[%s672] sm:$0xff]
        %v674 = vld [vmem:[%s672 + $0x8] sm:$0xff]
        %v675 = vld [vmem:[%s672 + $0x10] sm:$0xff]
        %v676 = vld [vmem:[%s672 + $0x18] sm:$0xff]
        %v677 = vld [vmem:[%s672 + $0x20] sm:$0xff]
        %v678 = vld [vmem:[%s672 + $0x28] sm:$0xff]
        %v679 = vld [vmem:[%s672 + $0x30] sm:$0xff]
        %v680 = vld [vmem:[%s672 + $0x38] sm:$0xff]
        %v681 = vld [vmem:[%s672 + $0x40] sm:$0xff]
        %v682 = vld [vmem:[%s672 + $0x48] sm:$0xff]
        %v683 = vld [vmem:[%s672 + $0x50] sm:$0xff]
        %v684 = vld [vmem:[%s672 + $0x58] sm:$0xff]
        %v685 = vld [vmem:[%s672 + $0x60] sm:$0xff]
        %v686 = vld [vmem:[%s672 + $0x68] sm:$0xff]
        %v687 = vld [vmem:[%s672 + $0x70] sm:$0xff]
        %v688 = vld [vmem:[%s672 + $0x78] sm:$0xff]
        %689 = vxpose.xlu0.c.b16.start [1/8] %v535, 128
        %690 = vxpose.xlu0.c.b16.cont [2/8] %v536, 128
        %691 = vxpose.xlu0.c.b16.cont [3/8] %v537, 128
        %692 = vxpose.xlu0.c.b16.cont [4/8] %v538, 128
        %693 = vxpose.xlu0.c.b16.cont [5/8] 0, 128
        %694 = vxpose.xlu0.c.b16.cont [6/8] 0, 128
        %695 = vxpose.xlu0.c.b16.cont [7/8] 0, 128
        %696 = vxpose.xlu0.c.b16.end [8/8] 0, 128
        %v697 = vpop.trf.xlu0
        %v698 = vpop.trf.xlu0
        %v699 = vpop.trf.xlu0
        %v700 = vpop.trf.xlu0
        %v701 = vpop.trf.xlu0
        %v702 = vpop.trf.xlu0
        %v703 = vpop.trf.xlu0
        %v704 = vpop.trf.xlu0
        %v713 = vunpack.c.l.b16 %v502
        %v714 = vunpack.c.l.b16 %v503
        %v715 = vunpack.c.l.b16 %v504
        %v716 = vunpack.c.l.b16 %v505
        %v717 = vunpack.c.l.b16 %v506
        %v718 = vunpack.c.l.b16 %v507
        %v719 = vunpack.c.l.b16 %v508
        %v720 = vunpack.c.l.b16 %v509
        %v721 = vpack.c.b16 %v714, %v713
        %v722 = vpack.c.b16 %v716, %v715
        %v723 = vpack.c.b16 %v718, %v717
        %v724 = vpack.c.b16 %v720, %v719
        %vm729 = vcmask 523264
        %v731 = vsel %vm729, %v697, 0
        %v734 = vsel %vm729, %v698, 0
        %v737 = vsel %vm729, %v699, 0
        %v740 = vsel %vm729, %v700, 0
        %v743 = vsel %vm729, %v701, 0
        %v746 = vsel %vm729, %v702, 0
        %v749 = vsel %vm729, %v703, 0
        %v752 = vsel %vm729, %v704, 0
        %754 = vmatprep.subr.bf16.mxu0 0
        %755 = vmatpush1.bf16.msra.mxu0 0
        %756 = vmatprep.subr.bf16.mxu0 0
        %757 = vmatpush1.bf16.msra.mxu0 0
        %758 = vmatprep.subr.bf16.mxu0 0
        %759 = vmatpush1.bf16.msra.mxu0 0
        %760 = vmatprep.subr.bf16.mxu0 0
        %761 = vmatpush1.bf16.msra.mxu0 0
        %762 = vmatprep.subr.bf16.mxu0 0
        %763 = vmatpush1.bf16.msra.mxu0 %v724
        %764 = vmatprep.subr.bf16.mxu0 0
        %765 = vmatpush1.bf16.msra.mxu0 %v723
        %766 = vmatprep.subr.bf16.mxu0 0
        %767 = vmatpush1.bf16.msra.mxu0 %v722
        %768 = vmatprep.subr.bf16.mxu0 0
        %769 = vmatpush1.bf16.msra.mxu0 %v721
        %770 = vmatprep.subr.bf16.mxu0 0
        %771 = vmatpush2.bf16.msra.mxu0 0
        %772 = vmatprep.subr.bf16.mxu0 0
        %773 = vmatpush2.bf16.msra.mxu0 0
        %774 = vmatprep.subr.bf16.mxu0 0
        %775 = vmatpush2.bf16.msra.mxu0 0
        %776 = vmatprep.subr.bf16.mxu0 0
        %777 = vmatpush2.bf16.msra.mxu0 0
        %778 = vmatprep.subr.bf16.mxu0 0
        %779 = vmatpush2.bf16.msra.mxu0 0
        %780 = vmatprep.subr.bf16.mxu0 0
        %781 = vmatpush2.bf16.msra.mxu0 0
        %782 = vmatprep.subr.bf16.mxu0 0
        %783 = vmatpush2.bf16.msra.mxu0 0
        %784 = vmatprep.subr.bf16.mxu0 0
        %785 = vmatpush2.bf16.msra.mxu0 0
        %786 = vmatprep.mubr.bf16.mxu0 0
        %787 = vmatmul.mubr.bf16.gmra.mxu0 %v731
        %v788 = vpop.f32.mrf.mxu0
        %v789 = vadd.f32 0.0, %v788
        %v790 = vpop.f32.mrf.mxu0
        %v791 = vpop.f32.mrf.mxu0
        %v792 = vadd.f32 0.0, %v791
        %v793 = vpop.f32.mrf.mxu0
        %794 = vmatprep.mubr.bf16.mxu0 0
        %795 = vmatmul.mubr.bf16.gmra.mxu0 %v734
        %v796 = vpop.f32.mrf.mxu0
        %v797 = vadd.f32 0.0, %v796
        %v798 = vpop.f32.mrf.mxu0
        %v799 = vpop.f32.mrf.mxu0
        %v800 = vadd.f32 0.0, %v799
        %v801 = vpop.f32.mrf.mxu0
        %802 = vmatprep.mubr.bf16.mxu0 0
        %803 = vmatmul.mubr.bf16.gmra.mxu0 %v737
        %v804 = vpop.f32.mrf.mxu0
        %v805 = vadd.f32 0.0, %v804
        %v806 = vpop.f32.mrf.mxu0
        %v807 = vpop.f32.mrf.mxu0
        %v808 = vadd.f32 0.0, %v807
        %v809 = vpop.f32.mrf.mxu0
        %810 = vmatprep.mubr.bf16.mxu0 0
        %811 = vmatmul.mubr.bf16.gmra.mxu0 %v740
        %v812 = vpop.f32.mrf.mxu0
        %v813 = vadd.f32 0.0, %v812
        %v814 = vpop.f32.mrf.mxu0
        %v815 = vpop.f32.mrf.mxu0
        %v816 = vadd.f32 0.0, %v815
        %v817 = vpop.f32.mrf.mxu0
        %818 = vmatprep.mubr.bf16.mxu0 0
        %819 = vmatmul.mubr.bf16.gmra.mxu0 %v743
        %v820 = vpop.f32.mrf.mxu0
        %v821 = vadd.f32 0.0, %v820
        %v822 = vpop.f32.mrf.mxu0
        %v823 = vpop.f32.mrf.mxu0
        %v824 = vadd.f32 0.0, %v823
        %v825 = vpop.f32.mrf.mxu0
        %826 = vmatprep.mubr.bf16.mxu0 0
        %827 = vmatmul.mubr.bf16.gmra.mxu0 %v746
        %v828 = vpop.f32.mrf.mxu0
        %v829 = vadd.f32 0.0, %v828
        %v830 = vpop.f32.mrf.mxu0
        %v831 = vpop.f32.mrf.mxu0
        %v832 = vadd.f32 0.0, %v831
        %v833 = vpop.f32.mrf.mxu0
        %834 = vmatprep.mubr.bf16.mxu0 0
        %835 = vmatmul.mubr.bf16.gmra.mxu0 %v749
        %v836 = vpop.f32.mrf.mxu0
        %v837 = vadd.f32 0.0, %v836
        %v838 = vpop.f32.mrf.mxu0
        %v839 = vpop.f32.mrf.mxu0
        %v840 = vadd.f32 0.0, %v839
        %v841 = vpop.f32.mrf.mxu0
        %842 = vmatprep.mubr.bf16.mxu0 0
        %843 = vmatmul.mubr.bf16.gmra.mxu0 %v752
        %v844 = vpop.f32.mrf.mxu0
        %v845 = vadd.f32 0.0, %v844
        %v846 = vpop.f32.mrf.mxu0
        %v847 = vpop.f32.mrf.mxu0
        %v848 = vadd.f32 0.0, %v847
        %v849 = vpop.f32.mrf.mxu0
        %850 = vdwg.mxu0
        %v851 = vadd.f32 %v673, %v789
        %v852 = vadd.f32 %v674, %v792
        %v853 = vadd.f32 %v675, %v797
        %v854 = vadd.f32 %v676, %v800
        %v855 = vadd.f32 %v677, %v805
        %v856 = vadd.f32 %v678, %v808
        %v857 = vadd.f32 %v679, %v813
        %v858 = vadd.f32 %v680, %v816
        %v859 = vadd.f32 %v681, %v821
        %v860 = vadd.f32 %v682, %v824
        %v861 = vadd.f32 %v683, %v829
        %v862 = vadd.f32 %v684, %v832
        %v863 = vadd.f32 %v685, %v837
        %v864 = vadd.f32 %v686, %v840
        %v865 = vadd.f32 %v687, %v845
        %v866 = vadd.f32 %v688, %v848
        %867 = vst [vmem:[%s672] sm:$0xff] %v851
        %868 = vst [vmem:[%s672 + $0x8] sm:$0xff] %v852
        %869 = vst [vmem:[%s672 + $0x10] sm:$0xff] %v853
        %870 = vst [vmem:[%s672 + $0x18] sm:$0xff] %v854
        %871 = vst [vmem:[%s672 + $0x20] sm:$0xff] %v855
        %872 = vst [vmem:[%s672 + $0x28] sm:$0xff] %v856
        %873 = vst [vmem:[%s672 + $0x30] sm:$0xff] %v857
        %874 = vst [vmem:[%s672 + $0x38] sm:$0xff] %v858
        %875 = vst [vmem:[%s672 + $0x40] sm:$0xff] %v859
        %876 = vst [vmem:[%s672 + $0x48] sm:$0xff] %v860
        %877 = vst [vmem:[%s672 + $0x50] sm:$0xff] %v861
        %878 = vst [vmem:[%s672 + $0x58] sm:$0xff] %v862
        %879 = vst [vmem:[%s672 + $0x60] sm:$0xff] %v863
        %880 = vst [vmem:[%s672 + $0x68] sm:$0xff] %v864
        %881 = vst [vmem:[%s672 + $0x70] sm:$0xff] %v865
        %882 = vst [vmem:[%s672 + $0x78] sm:$0xff] %v866
        // Predicated region
        $region53: #{tpu_custom_call.1} parent=31 // pred_check
          _
        $region54: #{tpu_custom_call.1} parent=31 // pred_check_branch
          %884 = sbr.rel (%p440) target = $region56
        $region55: #{tpu_custom_call.1} parent=31 // pred_region
          %v885 = vld [vmem:[#allocation12] sm:$0xff]
          %v886 = vld [vmem:[#allocation12 + $0x8] sm:$0xff]
          %v887 = vld [vmem:[#allocation12 + $0x10] sm:$0xff]
          %v888 = vld [vmem:[#allocation12 + $0x18] sm:$0xff]
          %v889 = vld [vmem:[#allocation12 + $0x20] sm:$0xff]
          %v890 = vld [vmem:[#allocation12 + $0x28] sm:$0xff]
          %v891 = vld [vmem:[#allocation12 + $0x30] sm:$0xff]
          %v892 = vld [vmem:[#allocation12 + $0x38] sm:$0xff]
          %v893 = vld [vmem:[#allocation4] sm:$0xff]
          %v894 = vld [vmem:[#allocation4 + $0x8] sm:$0xff]
          %v895 = vld [vmem:[#allocation4 + $0x10] sm:$0xff]
          %v896 = vld [vmem:[#allocation4 + $0x18] sm:$0xff]
          %v897 = vld [vmem:[#allocation4 + $0x20] sm:$0xff]
          %v898 = vld [vmem:[#allocation4 + $0x28] sm:$0xff]
          %v899 = vld [vmem:[#allocation4 + $0x30] sm:$0xff]
          %v900 = vld [vmem:[#allocation4 + $0x38] sm:$0xff]
          %v901 = vadd.f32 %v885, %v893
          %v902 = vadd.f32 %v886, %v894
          %v903 = vadd.f32 %v887, %v895
          %v904 = vadd.f32 %v888, %v896
          %v905 = vadd.f32 %v889, %v897
          %v906 = vadd.f32 %v890, %v898
          %v907 = vadd.f32 %v891, %v899
          %v908 = vadd.f32 %v892, %v900
          %909 = vst [vmem:[#allocation12] sm:$0xff] %v901
          %910 = vst [vmem:[#allocation12 + $0x8] sm:$0xff] %v902
          %911 = vst [vmem:[#allocation12 + $0x10] sm:$0xff] %v903
          %912 = vst [vmem:[#allocation12 + $0x18] sm:$0xff] %v904
          %913 = vst [vmem:[#allocation12 + $0x20] sm:$0xff] %v905
          %914 = vst [vmem:[#allocation12 + $0x28] sm:$0xff] %v906
          %915 = vst [vmem:[#allocation12 + $0x30] sm:$0xff] %v907
          %916 = vst [vmem:[#allocation12 + $0x38] sm:$0xff] %v908
          %v917 = vld [vmem:[#allocation13] sm:$0xff]
          %v918 = vld [vmem:[#allocation13 + $0x8] sm:$0xff]
          %v919 = vld [vmem:[#allocation13 + $0x10] sm:$0xff]
          %v920 = vld [vmem:[#allocation13 + $0x18] sm:$0xff]
          %v921 = vld [vmem:[#allocation13 + $0x20] sm:$0xff]
          %v922 = vld [vmem:[#allocation13 + $0x28] sm:$0xff]
          %v923 = vld [vmem:[#allocation13 + $0x30] sm:$0xff]
          %v924 = vld [vmem:[#allocation13 + $0x38] sm:$0xff]
          %v925 = vld [vmem:[#allocation13 + $0x40] sm:$0xff]
          %v926 = vld [vmem:[#allocation13 + $0x48] sm:$0xff]
          %v927 = vld [vmem:[#allocation13 + $0x50] sm:$0xff]
          %v928 = vld [vmem:[#allocation13 + $0x58] sm:$0xff]
          %v929 = vld [vmem:[#allocation13 + $0x60] sm:$0xff]
          %v930 = vld [vmem:[#allocation13 + $0x68] sm:$0xff]
          %v931 = vld [vmem:[#allocation13 + $0x70] sm:$0xff]
          %v932 = vld [vmem:[#allocation13 + $0x78] sm:$0xff]
          %v933 = vld [vmem:[#allocation5] sm:$0xff]
          %v934 = vld [vmem:[#allocation5 + $0x8] sm:$0xff]
          %v935 = vld [vmem:[#allocation5 + $0x10] sm:$0xff]
          %v936 = vld [vmem:[#allocation5 + $0x18] sm:$0xff]
          %v937 = vld [vmem:[#allocation5 + $0x20] sm:$0xff]
          %v938 = vld [vmem:[#allocation5 + $0x28] sm:$0xff]
          %v939 = vld [vmem:[#allocation5 + $0x30] sm:$0xff]
          %v940 = vld [vmem:[#allocation5 + $0x38] sm:$0xff]
          %v941 = vld [vmem:[#allocation5 + $0x40] sm:$0xff]
          %v942 = vld [vmem:[#allocation5 + $0x48] sm:$0xff]
          %v943 = vld [vmem:[#allocation5 + $0x50] sm:$0xff]
          %v944 = vld [vmem:[#allocation5 + $0x58] sm:$0xff]
          %v945 = vld [vmem:[#allocation5 + $0x60] sm:$0xff]
          %v946 = vld [vmem:[#allocation5 + $0x68] sm:$0xff]
          %v947 = vld [vmem:[#allocation5 + $0x70] sm:$0xff]
          %v948 = vld [vmem:[#allocation5 + $0x78] sm:$0xff]
          %v949 = vadd.f32 %v917, %v933
          %v950 = vadd.f32 %v918, %v934
          %v951 = vadd.f32 %v919, %v935
          %v952 = vadd.f32 %v920, %v936
          %v953 = vadd.f32 %v921, %v937
          %v954 = vadd.f32 %v922, %v938
          %v955 = vadd.f32 %v923, %v939
          %v956 = vadd.f32 %v924, %v940
          %v957 = vadd.f32 %v925, %v941
          %v958 = vadd.f32 %v926, %v942
          %v959 = vadd.f32 %v927, %v943
          %v960 = vadd.f32 %v928, %v944
          %v961 = vadd.f32 %v929, %v945
          %v962 = vadd.f32 %v930, %v946
          %v963 = vadd.f32 %v931, %v947
          %v964 = vadd.f32 %v932, %v948
          %965 = vst [vmem:[#allocation13] sm:$0xff] %v949
          %966 = vst [vmem:[#allocation13 + $0x8] sm:$0xff] %v950
          %967 = vst [vmem:[#allocation13 + $0x10] sm:$0xff] %v951
          %968 = vst [vmem:[#allocation13 + $0x18] sm:$0xff] %v952
          %969 = vst [vmem:[#allocation13 + $0x20] sm:$0xff] %v953
          %970 = vst [vmem:[#allocation13 + $0x28] sm:$0xff] %v954
          %971 = vst [vmem:[#allocation13 + $0x30] sm:$0xff] %v955
          %972 = vst [vmem:[#allocation13 + $0x38] sm:$0xff] %v956
          %973 = vst [vmem:[#allocation13 + $0x40] sm:$0xff] %v957
          %974 = vst [vmem:[#allocation13 + $0x48] sm:$0xff] %v958
          %975 = vst [vmem:[#allocation13 + $0x50] sm:$0xff] %v959
          %976 = vst [vmem:[#allocation13 + $0x58] sm:$0xff] %v960
          %977 = vst [vmem:[#allocation13 + $0x60] sm:$0xff] %v961
          %978 = vst [vmem:[#allocation13 + $0x68] sm:$0xff] %v962
          %979 = vst [vmem:[#allocation13 + $0x70] sm:$0xff] %v963
          %980 = vst [vmem:[#allocation13 + $0x78] sm:$0xff] %v964
          %v981 = vld [vmem:[#allocation4] sm:$0xff]
          %v982 = vld [vmem:[#allocation4 + $0x8] sm:$0xff]
          %v983 = vld [vmem:[#allocation4 + $0x10] sm:$0xff]
          %v984 = vld [vmem:[#allocation4 + $0x18] sm:$0xff]
          %v985 = vld [vmem:[#allocation4 + $0x20] sm:$0xff]
          %v986 = vld [vmem:[#allocation4 + $0x28] sm:$0xff]
          %v987 = vld [vmem:[#allocation4 + $0x30] sm:$0xff]
          %v988 = vld [vmem:[#allocation4 + $0x38] sm:$0xff]
          %v989 = vpack.c.bf16 %v982, %v981
          %v990 = vpack.c.bf16 %v984, %v983
          %v991 = vpack.c.bf16 %v986, %v985
          %v992 = vpack.c.bf16 %v988, %v987
          %v997 = vunpack.c.l.b16 %v989
          %v998 = vunpack.c.h.b16 %v989
          %v999 = vunpack.c.l.b16 %v990
          %v1000 = vunpack.c.h.b16 %v990
          %v1001 = vunpack.c.l.b16 %v991
          %v1002 = vunpack.c.h.b16 %v991
          %v1003 = vunpack.c.l.b16 %v992
          %v1004 = vunpack.c.h.b16 %v992
          %v1005 = vpack.c.b16 %v997, %v997
          %v1006 = vpack.c.b16 %v998, %v998
          %v1007 = vpack.c.b16 %v999, %v999
          %v1008 = vpack.c.b16 %v1000, %v1000
          %v1009 = vpack.c.b16 %v1001, %v1001
          %v1010 = vpack.c.b16 %v1002, %v1002
          %v1011 = vpack.c.b16 %v1003, %v1003
          %v1012 = vpack.c.b16 %v1004, %v1004
          %1021 = vst [vmem:[#allocation2] sm:$0xf] %v1005
          %1022 = vst [vmem:[#allocation2 + $0x4] sm:$0xf] %v1006
          %1023 = vst [vmem:[#allocation2 + $0x8] sm:$0xf] %v1007
          %1024 = vst [vmem:[#allocation2 + $0xc] sm:$0xf] %v1008
          %1025 = vst [vmem:[#allocation2 + $0x10] sm:$0xf] %v1009
          %1026 = vst [vmem:[#allocation2 + $0x14] sm:$0xf] %v1010
          %1027 = vst [vmem:[#allocation2 + $0x18] sm:$0xf] %v1011
          %1028 = vst [vmem:[#allocation2 + $0x1c] sm:$0xf] %v1012
          %v1029 = vld [vmem:[#allocation5] sm:$0xff]
          %v1030 = vld [vmem:[#allocation5 + $0x8] sm:$0xff]
          %v1031 = vld [vmem:[#allocation5 + $0x10] sm:$0xff]
          %v1032 = vld [vmem:[#allocation5 + $0x18] sm:$0xff]
          %v1033 = vld [vmem:[#allocation5 + $0x20] sm:$0xff]
          %v1034 = vld [vmem:[#allocation5 + $0x28] sm:$0xff]
          %v1035 = vld [vmem:[#allocation5 + $0x30] sm:$0xff]
          %v1036 = vld [vmem:[#allocation5 + $0x38] sm:$0xff]
          %v1037 = vld [vmem:[#allocation5 + $0x40] sm:$0xff]
          %v1038 = vld [vmem:[#allocation5 + $0x48] sm:$0xff]
          %v1039 = vld [vmem:[#allocation5 + $0x50] sm:$0xff]
          %v1040 = vld [vmem:[#allocation5 + $0x58] sm:$0xff]
          %v1041 = vld [vmem:[#allocation5 + $0x60] sm:$0xff]
          %v1042 = vld [vmem:[#allocation5 + $0x68] sm:$0xff]
          %v1043 = vld [vmem:[#allocation5 + $0x70] sm:$0xff]
          %v1044 = vld [vmem:[#allocation5 + $0x78] sm:$0xff]
          %v1045 = vpack.c.bf16 %v1030, %v1029
          %v1046 = vpack.c.bf16 %v1032, %v1031
          %v1047 = vpack.c.bf16 %v1034, %v1033
          %v1048 = vpack.c.bf16 %v1036, %v1035
          %v1049 = vpack.c.bf16 %v1038, %v1037
          %v1050 = vpack.c.bf16 %v1040, %v1039
          %v1051 = vpack.c.bf16 %v1042, %v1041
          %v1052 = vpack.c.bf16 %v1044, %v1043
          %v1061 = vunpack.c.l.b16 %v1045
          %v1062 = vunpack.c.h.b16 %v1045
          %v1063 = vunpack.c.l.b16 %v1046
          %v1064 = vunpack.c.h.b16 %v1046
          %v1065 = vunpack.c.l.b16 %v1047
          %v1066 = vunpack.c.h.b16 %v1047
          %v1067 = vunpack.c.l.b16 %v1048
          %v1068 = vunpack.c.h.b16 %v1048
          %v1069 = vunpack.c.l.b16 %v1049
          %v1070 = vunpack.c.h.b16 %v1049
          %v1071 = vunpack.c.l.b16 %v1050
          %v1072 = vunpack.c.h.b16 %v1050
          %v1073 = vunpack.c.l.b16 %v1051
          %v1074 = vunpack.c.h.b16 %v1051
          %v1075 = vunpack.c.l.b16 %v1052
          %v1076 = vunpack.c.h.b16 %v1052
          %v1077 = vpack.c.b16 %v1061, %v1061
          %v1078 = vpack.c.b16 %v1062, %v1062
          %v1079 = vpack.c.b16 %v1063, %v1063
          %v1080 = vpack.c.b16 %v1064, %v1064
          %v1081 = vpack.c.b16 %v1065, %v1065
          %v1082 = vpack.c.b16 %v1066, %v1066
          %v1083 = vpack.c.b16 %v1067, %v1067
          %v1084 = vpack.c.b16 %v1068, %v1068
          %v1085 = vpack.c.b16 %v1069, %v1069
          %v1086 = vpack.c.b16 %v1070, %v1070
          %v1087 = vpack.c.b16 %v1071, %v1071
          %v1088 = vpack.c.b16 %v1072, %v1072
          %v1089 = vpack.c.b16 %v1073, %v1073
          %v1090 = vpack.c.b16 %v1074, %v1074
          %v1091 = vpack.c.b16 %v1075, %v1075
          %v1092 = vpack.c.b16 %v1076, %v1076
          %1109 = vst [vmem:[#allocation3] sm:$0xf] %v1077
          %1110 = vst [vmem:[#allocation3 + $0x4] sm:$0xf] %v1078
          %1111 = vst [vmem:[#allocation3 + $0x8] sm:$0xf] %v1079
          %1112 = vst [vmem:[#allocation3 + $0xc] sm:$0xf] %v1080
          %1113 = vst [vmem:[#allocation3 + $0x10] sm:$0xf] %v1081
          %1114 = vst [vmem:[#allocation3 + $0x14] sm:$0xf] %v1082
          %1115 = vst [vmem:[#allocation3 + $0x18] sm:$0xf] %v1083
          %1116 = vst [vmem:[#allocation3 + $0x1c] sm:$0xf] %v1084
          %1117 = vst [vmem:[#allocation3 + $0x20] sm:$0xf] %v1085
          %1118 = vst [vmem:[#allocation3 + $0x24] sm:$0xf] %v1086
          %1119 = vst [vmem:[#allocation3 + $0x28] sm:$0xf] %v1087
          %1120 = vst [vmem:[#allocation3 + $0x2c] sm:$0xf] %v1088
          %1121 = vst [vmem:[#allocation3 + $0x30] sm:$0xf] %v1089
          %1122 = vst [vmem:[#allocation3 + $0x34] sm:$0xf] %v1090
          %1123 = vst [vmem:[#allocation3 + $0x38] sm:$0xf] %v1091
          %1124 = vst [vmem:[#allocation3 + $0x3c] sm:$0xf] %v1092
        $region56: #{tpu_custom_call.1} parent=31 // pred_fallthru
          _
        %p1125 = scmp.eq.s32.totalorder %s25, 2
        %p1126 = pnand %p1125, %p240
        %p1127 = pneg %p1126
        %p1128 = pnand %p1127, %p243
        %p1129 = pneg %p1128
        // Predicated region
        $region57: #{tpu_custom_call.1} parent=31 // pred_check
          _
        $region58: #{tpu_custom_call.1} parent=31 // pred_check_branch
          %1131 = sbr.rel (%p1128) target = $region60
        $region59: #{tpu_custom_call.1} parent=31 // pred_region
          %v1132 = vld [vmem:[#allocation12] sm:$0xff]
          %v1133 = vld [vmem:[#allocation12 + $0x8] sm:$0xff]
          %v1134 = vld [vmem:[#allocation12 + $0x10] sm:$0xff]
          %v1135 = vld [vmem:[#allocation12 + $0x18] sm:$0xff]
          %v1136 = vld [vmem:[#allocation12 + $0x20] sm:$0xff]
          %v1137 = vld [vmem:[#allocation12 + $0x28] sm:$0xff]
          %v1138 = vld [vmem:[#allocation12 + $0x30] sm:$0xff]
          %v1139 = vld [vmem:[#allocation12 + $0x38] sm:$0xff]
          %v1140 = vmul.f32 %v1132, 0.25
          %v1141 = vmul.f32 %v1133, 0.25
          %v1142 = vmul.f32 %v1134, 0.25
          %v1143 = vmul.f32 %v1135, 0.25
          %v1144 = vmul.f32 %v1136, 0.25
          %v1145 = vmul.f32 %v1137, 0.25
          %v1146 = vmul.f32 %v1138, 0.25
          %v1147 = vmul.f32 %v1139, 0.25
          %1148 = vst [vmem:[#allocation12] sm:$0xff] %v1140
          %1149 = vst [vmem:[#allocation12 + $0x8] sm:$0xff] %v1141
          %1150 = vst [vmem:[#allocation12 + $0x10] sm:$0xff] %v1142
          %1151 = vst [vmem:[#allocation12 + $0x18] sm:$0xff] %v1143
          %1152 = vst [vmem:[#allocation12 + $0x20] sm:$0xff] %v1144
          %1153 = vst [vmem:[#allocation12 + $0x28] sm:$0xff] %v1145
          %1154 = vst [vmem:[#allocation12 + $0x30] sm:$0xff] %v1146
          %1155 = vst [vmem:[#allocation12 + $0x38] sm:$0xff] %v1147
          %v1156 = vld [vmem:[#allocation13] sm:$0xff]
          %v1157 = vld [vmem:[#allocation13 + $0x8] sm:$0xff]
          %v1158 = vld [vmem:[#allocation13 + $0x10] sm:$0xff]
          %v1159 = vld [vmem:[#allocation13 + $0x18] sm:$0xff]
          %v1160 = vld [vmem:[#allocation13 + $0x20] sm:$0xff]
          %v1161 = vld [vmem:[#allocation13 + $0x28] sm:$0xff]
          %v1162 = vld [vmem:[#allocation13 + $0x30] sm:$0xff]
          %v1163 = vld [vmem:[#allocation13 + $0x38] sm:$0xff]
          %v1164 = vld [vmem:[#allocation13 + $0x40] sm:$0xff]
          %v1165 = vld [vmem:[#allocation13 + $0x48] sm:$0xff]
          %v1166 = vld [vmem:[#allocation13 + $0x50] sm:$0xff]
          %v1167 = vld [vmem:[#allocation13 + $0x58] sm:$0xff]
          %v1168 = vld [vmem:[#allocation13 + $0x60] sm:$0xff]
          %v1169 = vld [vmem:[#allocation13 + $0x68] sm:$0xff]
          %v1170 = vld [vmem:[#allocation13 + $0x70] sm:$0xff]
          %v1171 = vld [vmem:[#allocation13 + $0x78] sm:$0xff]
          %v1172 = vmul.f32 %v1156, 0.25
          %v1173 = vmul.f32 %v1157, 0.25
          %v1174 = vmul.f32 %v1158, 0.25
          %v1175 = vmul.f32 %v1159, 0.25
          %v1176 = vmul.f32 %v1160, 0.25
          %v1177 = vmul.f32 %v1161, 0.25
          %v1178 = vmul.f32 %v1162, 0.25
          %v1179 = vmul.f32 %v1163, 0.25
          %v1180 = vmul.f32 %v1164, 0.25
          %v1181 = vmul.f32 %v1165, 0.25
          %v1182 = vmul.f32 %v1166, 0.25
          %v1183 = vmul.f32 %v1167, 0.25
          %v1184 = vmul.f32 %v1168, 0.25
          %v1185 = vmul.f32 %v1169, 0.25
          %v1186 = vmul.f32 %v1170, 0.25
          %v1187 = vmul.f32 %v1171, 0.25
          %1188 = vst [vmem:[#allocation13] sm:$0xff] %v1172
          %1189 = vst [vmem:[#allocation13 + $0x8] sm:$0xff] %v1173
          %1190 = vst [vmem:[#allocation13 + $0x10] sm:$0xff] %v1174
          %1191 = vst [vmem:[#allocation13 + $0x18] sm:$0xff] %v1175
          %1192 = vst [vmem:[#allocation13 + $0x20] sm:$0xff] %v1176
          %1193 = vst [vmem:[#allocation13 + $0x28] sm:$0xff] %v1177
          %1194 = vst [vmem:[#allocation13 + $0x30] sm:$0xff] %v1178
          %1195 = vst [vmem:[#allocation13 + $0x38] sm:$0xff] %v1179
          %1196 = vst [vmem:[#allocation13 + $0x40] sm:$0xff] %v1180
          %1197 = vst [vmem:[#allocation13 + $0x48] sm:$0xff] %v1181
          %1198 = vst [vmem:[#allocation13 + $0x50] sm:$0xff] %v1182
          %1199 = vst [vmem:[#allocation13 + $0x58] sm:$0xff] %v1183
          %1200 = vst [vmem:[#allocation13 + $0x60] sm:$0xff] %v1184
          %1201 = vst [vmem:[#allocation13 + $0x68] sm:$0xff] %v1185
          %1202 = vst [vmem:[#allocation13 + $0x70] sm:$0xff] %v1186
          %1203 = vst [vmem:[#allocation13 + $0x78] sm:$0xff] %v1187
        $region60: #{tpu_custom_call.1} parent=31 // pred_fallthru
          _
        // Predicated region
        $region61: #{tpu_custom_call.1} parent=31 // pred_check
          %p1204 = pneg %p122
        $region62: #{tpu_custom_call.1} parent=31 // pred_check_branch
          %1206 = sbr.rel (%p1204) target = $region64
        $region63: #{tpu_custom_call.1} parent=31 // pred_region
          %s1208 = ssub.s32 1024, 1024
          %1209 = vsyncadd [#allocation8], %s1208
          %s1210 = sshll.u32 [#allocation12], 4
          %s1211 = int_to_ptr.vmem [resolvable:$true] %s1210
          %1216 = dma.vmem_to_hbm [thread:$0]  %s1211, 1024, %s3, [#allocation8], 128, 128, 8
        $region64: #{tpu_custom_call.1} parent=31 // pred_fallthru
          _
        // Predicated region
        $region65: #{tpu_custom_call.1} parent=31 // pred_check
          %p1217 = pneg %p143
        $region66: #{tpu_custom_call.1} parent=31 // pred_check_branch
          %1219 = sbr.rel (%p1217) target = $region68
        $region67: #{tpu_custom_call.1} parent=31 // pred_region
          %s1221 = ssub.s32 2048, 2048
          %1222 = vsyncadd [#allocation14], %s1221
          %s1223 = sshll.u32 [#allocation13], 4
          %s1224 = int_to_ptr.vmem [resolvable:$true] %s1223
          %1229 = dma.vmem_to_hbm [thread:$0]  %s1224, 2048, %s4, [#allocation14], 128, 128, 8
        $region68: #{tpu_custom_call.1} parent=31 // pred_fallthru
          _
        // Predicated region
        $region69: #{tpu_custom_call.1} parent=31 // pred_check
          %p1230 = pneg %p122
        $region70: #{tpu_custom_call.1} parent=31 // pred_check_branch
          %1232 = sbr.rel (%p1230) target = $region72
        $region71: #{tpu_custom_call.1} parent=31 // pred_region
          %1233 = dma.done [#allocation8], 1024
        $region72: #{tpu_custom_call.1} parent=31 // pred_fallthru
          _
        // Predicated region
        $region73: #{tpu_custom_call.1} parent=31 // pred_check
          %p1234 = pneg %p143
        $region74: #{tpu_custom_call.1} parent=31 // pred_check_branch
          %1236 = sbr.rel (%p1234) target = $region76
        $region75: #{tpu_custom_call.1} parent=31 // pred_region
          %1237 = dma.done [#allocation14], 2048
        $region76: #{tpu_custom_call.1} parent=31 // pred_fallthru
          _
      $region32: #{tpu_custom_call.1} parent=5 // pred_fallthru
        _
      %p1238 = scmp.le.s32.totalorder 2, %s15
      // Predicated region
      $region77: #{tpu_custom_call.1} parent=5 // pred_check
        %p1239 = pneg %p1238
      $region78: #{tpu_custom_call.1} parent=5 // pred_check_branch
        %1241 = sbr.rel (%p1239) target = $region80
      $region79: #{tpu_custom_call.1} parent=5 // pred_region
        %s1242 = ssub.s32 %s15, 2
      $region80: #{tpu_custom_call.1} parent=5 // pred_fallthru
        _
    $region6: #{tpu_custom_call.1} parent=1 // loop_footer
      %s19 = sadd.s32 1, %s15
    $region7: #{tpu_custom_call.1} parent=1 // loop_footer_branch
      %14 = sbr.rel target = $region3
    $region8: #{tpu_custom_call.1} parent=1 // loop_exit
      _
    %1243 = vsyncpa [#allocation7], 1
    %s1244 = scalar_lea.sflag [#allocation7], 1
    %1245 = vsyncpa %s1244, 1
    %1246 = vsyncpa [#allocation10], 1
    %1247 = vsyncpa [#allocation8], 1
    %s1248 = scalar_lea.sflag [#allocation8], 1
    %1249 = vsyncpa %s1248, 1
    %1250 = vsyncpa [#allocation14], 1

</llo_original>
